<compile_context>
chip_gen: v7x
topology: tpu7x:2x2x1
jax: 0.10.0
libtpu: 0.0.40
codegen_flags: <defaults>
</compile_context>

<pallas_src>
from functools import partial

import jax
import jax.numpy as jnp
from jax import lax
from jax.experimental import pallas as pl
from jax.experimental.pallas import tpu as pltpu

HP = 128  # padded hidden / fc-output lane block (one full vreg lane width)


# ---------------------------------------------------------------------------
# Kernel
# ---------------------------------------------------------------------------
def decoder_rnn_kernel(x_ref, slab_ref, out_ref):
    """GRU recurrence + fc(output[0]) in one kernel (batch==1, h0==0).

    x_ref:    (S, I_pad)                f32
    slab_ref: (I_pad + 2*HP + 8, 3*HP)  f32, packed weights/biases:
        rows [0, I_pad)          : [W_ih_r.T | W_ih_z.T | W_ih_n.T]  (lane-padded to HP each)
        rows [I_pad, I_pad+HP)   : [W_hh_r.T | W_hh_z.T | W_hh_n.T]
        rows [I_pad+HP, +2*HP)   : [W_fc.T   | 0        | 0       ]
        row  I_pad+2*HP          : [b_r      | b_z      | b_in    ]   (b_hh_r/z folded in)
        row  I_pad+2*HP+1        : [b_hn     | b_fc     | 0       ]
    out_ref:  (2, HP) f32 — row 0 = fc(output[0]) (lane-padded), row 1 = final hidden.
    """
    S, I_pad = x_ref.shape
    r_hh = I_pad
    r_fc = I_pad + HP
    r_b = I_pad + 2 * HP

    x = x_ref[...]                                              # (S, I_pad)
    w_ih = slab_ref[0:I_pad, :]                                 # (I_pad, 3*HP)
    b_rzn = slab_ref[r_b:r_b + 1, :]                            # (1, 3*HP)

    # Single fused input projection: all timesteps x all three gates on the MXU.
    gx = jnp.dot(x, w_ih, preferred_element_type=jnp.float32) + b_rzn   # (S, 3*HP)

    b_hn = slab_ref[r_b + 1:r_b + 2, 0:HP]                      # (1, HP)
    b_fc = slab_ref[r_b + 1:r_b + 2, HP:2 * HP]                 # (1, HP)

    # h0 = zeros (matches self.hidden_state = torch.zeros(1, 1, H)); padded
    # lanes of h provably stay exactly zero through the recurrence because the
    # padded weight rows/lanes and bias lanes are zero.
    h = jnp.zeros((1, HP), jnp.float32)

    # Fully unrolled serial recurrence: S is small & static, hidden state lives
    # in vregs, all slices are 128-lane / 8-sublane aligned.
    for t in range(S):
        # Loads inside the loop body → bounded live ranges (no spills).
        w_hh_rz = slab_ref[r_hh:r_hh + HP, 0:2 * HP]            # (HP, 2*HP)
        w_hh_n = slab_ref[r_hh:r_hh + HP, 2 * HP:3 * HP]        # (HP, HP)

        # r & z share one 256-wide MXU pass; n kept separate (r-scaled b_hn).
        gh_rz = jnp.dot(h, w_hh_rz, preferred_element_type=jnp.float32)        # (1, 2*HP)
        gh_n = jnp.dot(h, w_hh_n, preferred_element_type=jnp.float32) + b_hn   # (1, HP)

        gx_t = gx[t:t + 1, :]                                   # (1, 3*HP)
        r = jax.nn.sigmoid(gx_t[:, 0:HP] + gh_rz[:, 0:HP])
        z = jax.nn.sigmoid(gx_t[:, HP:2 * HP] + gh_rz[:, HP:2 * HP])
        n = jnp.tanh(gx_t[:, 2 * HP:3 * HP] + r * gh_n)
        h = (1.0 - z) * n + z * h

        if t == 0:
            # fc(output[0]) issued right here so the matmul + store hide under
            # the remaining serial recurrence steps.
            w_fc = slab_ref[r_fc:r_fc + HP, 0:HP]               # (HP, HP)
            out_ref[0:1, :] = (jnp.dot(h, w_fc, preferred_element_type=jnp.float32)
                               + b_fc)

    out_ref[1:2, :] = h                                         # final hidden


# ---------------------------------------------------------------------------
# One-time parameter preparation (hoisted out of the per-call path)
# ---------------------------------------------------------------------------
def prepare_params(params):
    """Split/transpose/pad the PyTorch-packed GRU+fc params into one f32 slab.

    Run once at parameter-load time; the returned slab is reused every call.
    Returns (slab, (H, O, I_pad)).
    """
    w_ih, w_hh, b_ih, b_hh, w_fc, b_fc = (
        params["w_ih"], params["w_hh"], params["b_ih"],
        params["b_hh"], params["w_fc"], params["b_fc"])
    H = w_hh.shape[1]
    I = w_ih.shape[1]
    O = w_fc.shape[0]
    assert H <= HP and O <= HP, "this layout assumes hidden/output <= 128"
    I_pad = ((I + 7) // 8) * 8

    def pad2(a, rows, cols):
        a = jnp.asarray(a, jnp.float32)
        return jnp.zeros((rows, cols), jnp.float32).at[:a.shape[0], :a.shape[1]].set(a)

    # Input-side weights: per-gate, transposed, each gate in its own HP-lane block.
    seg_ih = jnp.concatenate([pad2(w_ih[0:H].T, I_pad, HP),
                              pad2(w_ih[H:2 * H].T, I_pad, HP),
                              pad2(w_ih[2 * H:3 * H].T, I_pad, HP)], axis=1)

    # Hidden-side weights: same per-gate lane layout (r | z | n).
    seg_hh = jnp.concatenate([pad2(w_hh[0:H].T, HP, HP),
                              pad2(w_hh[H:2 * H].T, HP, HP),
                              pad2(w_hh[2 * H:3 * H].T, HP, HP)], axis=1)

    # fc weight (zero-padded contraction rows so padded h lanes cannot leak).
    seg_fc = jnp.concatenate([pad2(w_fc.T, HP, HP),
                              jnp.zeros((HP, 2 * HP), jnp.float32)], axis=1)

    # Biases: b_hh_r / b_hh_z folded into the input-side biases; b_hh_n stays
    # separate because it is scaled by r inside the new-gate.
    b_r = pad2((b_ih[0:H] + b_hh[0:H]).reshape(1, H), 1, HP)
    b_z = pad2((b_ih[H:2 * H] + b_hh[H:2 * H]).reshape(1, H), 1, HP)
    b_in = pad2(b_ih[2 * H:3 * H].reshape(1, H), 1, HP)
    b_hn = pad2(b_hh[2 * H:3 * H].reshape(1, H), 1, HP)
    b_fc_p = pad2(b_fc.reshape(1, O), 1, HP)
    bias_row0 = jnp.concatenate([b_r, b_z, b_in], axis=1)
    bias_row1 = jnp.concatenate([b_hn, b_fc_p, jnp.zeros((1, HP), jnp.float32)], axis=1)
    seg_b = jnp.concatenate([bias_row0, bias_row1,
                             jnp.zeros((6, 3 * HP), jnp.float32)], axis=0)  # pad to 8 rows

    slab = jnp.concatenate([seg_ih, seg_hh, seg_fc, seg_b], axis=0)  # (I_pad+2*HP+8, 3*HP)
    return slab, (H, O, I_pad)


# ---------------------------------------------------------------------------
# Per-call forward (jitted; only reshape/pad x, 1 pallas_call, 2 tiny slices)
# ---------------------------------------------------------------------------
@partial(jax.jit, static_argnames=("H", "O", "I_pad"))
def decoder_rnn_forward(x, slab, *, H, O, I_pad):
    """x: (seq_len, 1, input_size) f32. Returns (fc_out (1, O), h_final (1, 1, H))."""
    S, B, I = x.shape
    assert B == 1, "reference module uses batch=1 (hidden_state is (1,1,H))"
    x2d = x.reshape(S, I)
    if I_pad != I:
        x2d = jnp.pad(x2d, ((0, 0), (0, I_pad - I)))

    vmem = pl.BlockSpec(memory_space=pltpu.MemorySpace.VMEM)
    res = pl.pallas_call(
        decoder_rnn_kernel,
        out_shape=jax.ShapeDtypeStruct((2, HP), jnp.float32),
        in_specs=[vmem, vmem],
        out_specs=vmem,
    )(x2d, slab)

    fc_out = res[0:1, :O]
    h_final = res[1:2, :H].reshape(1, 1, H)
    return fc_out, h_final


# ---------------------------------------------------------------------------
# Pure-JAX reference (for correctness check)
# ---------------------------------------------------------------------------
def decoder_rnn_reference(x, params):
    S, B, I = x.shape
    w_ih, w_hh, b_ih, b_hh, w_fc, b_fc = (
        params["w_ih"], params["w_hh"], params["b_ih"],
        params["b_hh"], params["w_fc"], params["b_fc"])
    H = w_hh.shape[1]
    h = jnp.zeros((1, H), jnp.float32)

    def step(h, x_t):
        gx = x_t[None, :] @ w_ih.T + b_ih[None, :]
        gh = h @ w_hh.T + b_hh[None, :]
        r = jax.nn.sigmoid(gx[:, 0:H] + gh[:, 0:H])
        z = jax.nn.sigmoid(gx[:, H:2 * H] + gh[:, H:2 * H])
        n = jnp.tanh(gx[:, 2 * H:3 * H] + r * gh[:, 2 * H:3 * H])
        h_new = (1.0 - z) * n + z * h
        return h_new, h_new[0]

    h_final, outs = lax.scan(step, h, x[:, 0, :])
    fc_out = outs[0:1, :] @ w_fc.T + b_fc[None, :]
    return fc_out, h_final.reshape(1, 1, H)


def init_params(key, input_size, hidden_size, output_size):
    """Deterministic init mimicking PyTorch's U(-1/sqrt(H), 1/sqrt(H))."""
    ks = jax.random.split(key, 6)
    k = 1.0 / jnp.sqrt(jnp.float32(hidden_size))
    u = lambda kk, shape: jax.random.uniform(kk, shape, jnp.float32, -k, k)
    return {
        "w_ih": u(ks[0], (3 * hidden_size, input_size)),
        "w_hh": u(ks[1], (3 * hidden_size, hidden_size)),
        "b_ih": u(ks[2], (3 * hidden_size,)),
        "b_hh": u(ks[3], (3 * hidden_size,)),
        "w_fc": u(ks[4], (output_size, hidden_size)),
        "b_fc": u(ks[5], (output_size,)),
    }


if __name__ == "__main__":
    SEQ, INPUT, HIDDEN, OUT = 8, 32, 32, 1

    key = jax.random.PRNGKey(0)
    kx, kp = jax.random.split(key)
    x = jax.random.normal(kx, (SEQ, 1, INPUT), jnp.float32)  # (seq, batch=1, input)
    params = init_params(kp, INPUT, HIDDEN, OUT)

    # One-time parameter packing (cached across calls).
    slab, (H, O, I_pad) = prepare_params(params)
    slab = jax.block_until_ready(slab)

    fc_out, h_final = decoder_rnn_forward(x, slab, H=H, O=O, I_pad=I_pad)
    jax.block_until_ready((fc_out, h_final))

    ref_out, ref_h = decoder_rnn_reference(x, params)
    assert fc_out.shape == (1, OUT)
    assert h_final.shape == (1, 1, HIDDEN)
    assert jnp.allclose(fc_out, ref_out, atol=1e-5, rtol=1e-5)
    assert jnp.allclose(h_final, ref_h, atol=1e-5, rtol=1e-5)

    print("KERNEL_OK")
</pallas_src>

<mosaic_0001>
module attributes {stable_mosaic.version = 11 : i64} {
  func.func @decoder_rnn_kernel(%arg0: memref<8x32xf32, #tpu.memory_space<vmem>>, %arg1: memref<296x384xf32, #tpu.memory_space<vmem>>, %arg2: memref<2x128xf32, #tpu.memory_space<vmem>>) attributes {dimension_semantics = [], scalar_prefetch = 0 : i64, scratch_operands = 0 : i64, tpu.core_type = #tpu.core_type<tc>} {
    %c0 = arith.constant 0 : index
    %c0_0 = arith.constant 0 : index
    %0 = vector.load %arg0[%c0, %c0_0] : memref<8x32xf32, #tpu.memory_space<vmem>>, vector<8x32xf32>
    %c0_1 = arith.constant 0 : index
    %c0_2 = arith.constant 0 : index
    %1 = vector.load %arg1[%c0_1, %c0_2] : memref<296x384xf32, #tpu.memory_space<vmem>>, vector<32x384xf32>
    %c288 = arith.constant 288 : index
    %c0_3 = arith.constant 0 : index
    %2 = vector.load %arg1[%c288, %c0_3] : memref<296x384xf32, #tpu.memory_space<vmem>>, vector<1x384xf32>
    %cst = arith.constant dense<0.000000e+00> : vector<8x384xf32>
    %3 = tpu.matmul %0, %1, %cst {dimension_numbers = #tpu.dot_dimension_numbers<[1], [0], [0], [1], [0, 0, 1, 1], [], []>} : vector<8x32xf32>, vector<32x384xf32>, vector<8x384xf32> -> vector<8x384xf32>
    %4 = vector.broadcast %2 : vector<1x384xf32> to vector<8x384xf32>
    %5 = arith.addf %3, %4 : vector<8x384xf32>
    %c289 = arith.constant 289 : index
    %c0_4 = arith.constant 0 : index
    %6 = vector.load %arg1[%c289, %c0_4] : memref<296x384xf32, #tpu.memory_space<vmem>>, vector<1x128xf32>
    %c289_5 = arith.constant 289 : index
    %c128 = arith.constant 128 : index
    %7 = vector.load %arg1[%c289_5, %c128] : memref<296x384xf32, #tpu.memory_space<vmem>>, vector<1x128xf32>
    %cst_6 = arith.constant 0.000000e+00 : f32
    %8 = vector.broadcast %cst_6 : f32 to vector<1x128xf32>
    %c32 = arith.constant 32 : index
    %c0_7 = arith.constant 0 : index
    %9 = vector.load %arg1[%c32, %c0_7] : memref<296x384xf32, #tpu.memory_space<vmem>>, vector<128x256xf32>
    %c32_8 = arith.constant 32 : index
    %c256 = arith.constant 256 : index
    %10 = vector.load %arg1[%c32_8, %c256] : memref<296x384xf32, #tpu.memory_space<vmem>>, vector<128x128xf32>
    %cst_9 = arith.constant dense<0.000000e+00> : vector<1x256xf32>
    %11 = tpu.matmul %8, %9, %cst_9 {dimension_numbers = #tpu.dot_dimension_numbers<[1], [0], [0], [1], [0, 0, 1, 1], [], []>} : vector<1x128xf32>, vector<128x256xf32>, vector<1x256xf32> -> vector<1x256xf32>
    %cst_10 = arith.constant dense<0.000000e+00> : vector<1x128xf32>
    %12 = tpu.matmul %8, %10, %cst_10 {dimension_numbers = #tpu.dot_dimension_numbers<[1], [0], [0], [1], [0, 0, 1, 1], [], []>} : vector<1x128xf32>, vector<128x128xf32>, vector<1x128xf32> -> vector<1x128xf32>
    %13 = arith.addf %12, %6 : vector<1x128xf32>
    %14 = vector.extract_strided_slice %5 {offsets = [0, 0], sizes = [1, 384], strides = [1, 1]} : vector<8x384xf32> to vector<1x384xf32>
    %15 = vector.extract_strided_slice %14 {offsets = [0, 0], sizes = [1, 128], strides = [1, 1]} : vector<1x384xf32> to vector<1x128xf32>
    %16 = vector.extract_strided_slice %11 {offsets = [0, 0], sizes = [1, 128], strides = [1, 1]} : vector<1x256xf32> to vector<1x128xf32>
    %17 = arith.addf %15, %16 : vector<1x128xf32>
    %18 = arith.negf %17 : vector<1x128xf32>
    %19 = math.exp %18 : vector<1x128xf32>
    %cst_11 = arith.constant 1.000000e+00 : f32
    %20 = vector.broadcast %cst_11 : f32 to vector<1x128xf32>
    %21 = arith.addf %20, %19 : vector<1x128xf32>
    %22 = arith.divf %20, %21 : vector<1x128xf32>
    %23 = vector.extract_strided_slice %14 {offsets = [0, 128], sizes = [1, 128], strides = [1, 1]} : vector<1x384xf32> to vector<1x128xf32>
    %24 = vector.extract_strided_slice %11 {offsets = [0, 128], sizes = [1, 128], strides = [1, 1]} : vector<1x256xf32> to vector<1x128xf32>
    %25 = arith.addf %23, %24 : vector<1x128xf32>
    %26 = arith.negf %25 : vector<1x128xf32>
    %27 = math.exp %26 : vector<1x128xf32>
    %cst_12 = arith.constant 1.000000e+00 : f32
    %28 = vector.broadcast %cst_12 : f32 to vector<1x128xf32>
    %29 = arith.addf %28, %27 : vector<1x128xf32>
    %30 = arith.divf %28, %29 : vector<1x128xf32>
    %31 = vector.extract_strided_slice %14 {offsets = [0, 256], sizes = [1, 128], strides = [1, 1]} : vector<1x384xf32> to vector<1x128xf32>
    %32 = arith.mulf %22, %13 : vector<1x128xf32>
    %33 = arith.addf %31, %32 : vector<1x128xf32>
    %34 = math.tanh %33 : vector<1x128xf32>
    %cst_13 = arith.constant 1.000000e+00 : f32
    %35 = vector.broadcast %cst_13 : f32 to vector<1x128xf32>
    %36 = arith.subf %35, %30 : vector<1x128xf32>
    %37 = arith.mulf %36, %34 : vector<1x128xf32>
    %38 = arith.mulf %30, %8 : vector<1x128xf32>
    %39 = arith.addf %37, %38 : vector<1x128xf32>
    %c160 = arith.constant 160 : index
    %c0_14 = arith.constant 0 : index
    %40 = vector.load %arg1[%c160, %c0_14] : memref<296x384xf32, #tpu.memory_space<vmem>>, vector<128x128xf32>
    %cst_15 = arith.constant dense<0.000000e+00> : vector<1x128xf32>
    %41 = tpu.matmul %39, %40, %cst_15 {dimension_numbers = #tpu.dot_dimension_numbers<[1], [0], [0], [1], [0, 0, 1, 1], [], []>} : vector<1x128xf32>, vector<128x128xf32>, vector<1x128xf32> -> vector<1x128xf32>
    %42 = arith.addf %41, %7 : vector<1x128xf32>
    %c0_16 = arith.constant 0 : index
    %c0_17 = arith.constant 0 : index
    %43 = vector.load %arg2[%c0_16, %c0_17] : memref<2x128xf32, #tpu.memory_space<vmem>>, vector<1x128xf32>
    tpu.vector_store %arg2[%c0_16, %c0_17], %42 {strides = array<i32>} : memref<2x128xf32, #tpu.memory_space<vmem>>, vector<1x128xf32>,
    %c32_18 = arith.constant 32 : index
    %c0_19 = arith.constant 0 : index
    %44 = vector.load %arg1[%c32_18, %c0_19] : memref<296x384xf32, #tpu.memory_space<vmem>>, vector<128x256xf32>
    %c32_20 = arith.constant 32 : index
    %c256_21 = arith.constant 256 : index
    %45 = vector.load %arg1[%c32_20, %c256_21] : memref<296x384xf32, #tpu.memory_space<vmem>>, vector<128x128xf32>
    %cst_22 = arith.constant dense<0.000000e+00> : vector<1x256xf32>
    %46 = tpu.matmul %39, %44, %cst_22 {dimension_numbers = #tpu.dot_dimension_numbers<[1], [0], [0], [1], [0, 0, 1, 1], [], []>} : vector<1x128xf32>, vector<128x256xf32>, vector<1x256xf32> -> vector<1x256xf32>
    %cst_23 = arith.constant dense<0.000000e+00> : vector<1x128xf32>
    %47 = tpu.matmul %39, %45, %cst_23 {dimension_numbers = #tpu.dot_dimension_numbers<[1], [0], [0], [1], [0, 0, 1, 1], [], []>} : vector<1x128xf32>, vector<128x128xf32>, vector<1x128xf32> -> vector<1x128xf32>
    %48 = arith.addf %47, %6 : vector<1x128xf32>
    %49 = vector.extract_strided_slice %5 {offsets = [1, 0], sizes = [1, 384], strides = [1, 1]} : vector<8x384xf32> to vector<1x384xf32>
    %50 = vector.extract_strided_slice %49 {offsets = [0, 0], sizes = [1, 128], strides = [1, 1]} : vector<1x384xf32> to vector<1x128xf32>
    %51 = vector.extract_strided_slice %46 {offsets = [0, 0], sizes = [1, 128], strides = [1, 1]} : vector<1x256xf32> to vector<1x128xf32>
    %52 = arith.addf %50, %51 : vector<1x128xf32>
    %53 = arith.negf %52 : vector<1x128xf32>
    %54 = math.exp %53 : vector<1x128xf32>
    %cst_24 = arith.constant 1.000000e+00 : f32
    %55 = vector.broadcast %cst_24 : f32 to vector<1x128xf32>
    %56 = arith.addf %55, %54 : vector<1x128xf32>
    %57 = arith.divf %55, %56 : vector<1x128xf32>
    %58 = vector.extract_strided_slice %49 {offsets = [0, 128], sizes = [1, 128], strides = [1, 1]} : vector<1x384xf32> to vector<1x128xf32>
    %59 = vector.extract_strided_slice %46 {offsets = [0, 128], sizes = [1, 128], strides = [1, 1]} : vector<1x256xf32> to vector<1x128xf32>
    %60 = arith.addf %58, %59 : vector<1x128xf32>
    %61 = arith.negf %60 : vector<1x128xf32>
    %62 = math.exp %61 : vector<1x128xf32>
    %cst_25 = arith.constant 1.000000e+00 : f32
    %63 = vector.broadcast %cst_25 : f32 to vector<1x128xf32>
    %64 = arith.addf %63, %62 : vector<1x128xf32>
    %65 = arith.divf %63, %64 : vector<1x128xf32>
    %66 = vector.extract_strided_slice %49 {offsets = [0, 256], sizes = [1, 128], strides = [1, 1]} : vector<1x384xf32> to vector<1x128xf32>
    %67 = arith.mulf %57, %48 : vector<1x128xf32>
    %68 = arith.addf %66, %67 : vector<1x128xf32>
    %69 = math.tanh %68 : vector<1x128xf32>
    %cst_26 = arith.constant 1.000000e+00 : f32
    %70 = vector.broadcast %cst_26 : f32 to vector<1x128xf32>
    %71 = arith.subf %70, %65 : vector<1x128xf32>
    %72 = arith.mulf %71, %69 : vector<1x128xf32>
    %73 = arith.mulf %65, %39 : vector<1x128xf32>
    %74 = arith.addf %72, %73 : vector<1x128xf32>
    %c32_27 = arith.constant 32 : index
    %c0_28 = arith.constant 0 : index
    %75 = vector.load %arg1[%c32_27, %c0_28] : memref<296x384xf32, #tpu.memory_space<vmem>>, vector<128x256xf32>
    %c32_29 = arith.constant 32 : index
    %c256_30 = arith.constant 256 : index
    %76 = vector.load %arg1[%c32_29, %c256_30] : memref<296x384xf32, #tpu.memory_space<vmem>>, vector<128x128xf32>
    %cst_31 = arith.constant dense<0.000000e+00> : vector<1x256xf32>
    %77 = tpu.matmul %74, %75, %cst_31 {dimension_numbers = #tpu.dot_dimension_numbers<[1], [0], [0], [1], [0, 0, 1, 1], [], []>} : vector<1x128xf32>, vector<128x256xf32>, vector<1x256xf32> -> vector<1x256xf32>
    %cst_32 = arith.constant dense<0.000000e+00> : vector<1x128xf32>
    %78 = tpu.matmul %74, %76, %cst_32 {dimension_numbers = #tpu.dot_dimension_numbers<[1], [0], [0], [1], [0, 0, 1, 1], [], []>} : vector<1x128xf32>, vector<128x128xf32>, vector<1x128xf32> -> vector<1x128xf32>
    %79 = arith.addf %78, %6 : vector<1x128xf32>
    %80 = vector.extract_strided_slice %5 {offsets = [2, 0], sizes = [1, 384], strides = [1, 1]} : vector<8x384xf32> to vector<1x384xf32>
    %81 = vector.extract_strided_slice %80 {offsets = [0, 0], sizes = [1, 128], strides = [1, 1]} : vector<1x384xf32> to vector<1x128xf32>
    %82 = vector.extract_strided_slice %77 {offsets = [0, 0], sizes = [1, 128], strides = [1, 1]} : vector<1x256xf32> to vector<1x128xf32>
    %83 = arith.addf %81, %82 : vector<1x128xf32>
    %84 = arith.negf %83 : vector<1x128xf32>
    %85 = math.exp %84 : vector<1x128xf32>
    %cst_33 = arith.constant 1.000000e+00 : f32
    %86 = vector.broadcast %cst_33 : f32 to vector<1x128xf32>
    %87 = arith.addf %86, %85 : vector<1x128xf32>
    %88 = arith.divf %86, %87 : vector<1x128xf32>
    %89 = vector.extract_strided_slice %80 {offsets = [0, 128], sizes = [1, 128], strides = [1, 1]} : vector<1x384xf32> to vector<1x128xf32>
    %90 = vector.extract_strided_slice %77 {offsets = [0, 128], sizes = [1, 128], strides = [1, 1]} : vector<1x256xf32> to vector<1x128xf32>
    %91 = arith.addf %89, %90 : vector<1x128xf32>
    %92 = arith.negf %91 : vector<1x128xf32>
    %93 = math.exp %92 : vector<1x128xf32>
    %cst_34 = arith.constant 1.000000e+00 : f32
    %94 = vector.broadcast %cst_34 : f32 to vector<1x128xf32>
    %95 = arith.addf %94, %93 : vector<1x128xf32>
    %96 = arith.divf %94, %95 : vector<1x128xf32>
    %97 = vector.extract_strided_slice %80 {offsets = [0, 256], sizes = [1, 128], strides = [1, 1]} : vector<1x384xf32> to vector<1x128xf32>
    %98 = arith.mulf %88, %79 : vector<1x128xf32>
    %99 = arith.addf %97, %98 : vector<1x128xf32>
    %100 = math.tanh %99 : vector<1x128xf32>
    %cst_35 = arith.constant 1.000000e+00 : f32
    %101 = vector.broadcast %cst_35 : f32 to vector<1x128xf32>
    %102 = arith.subf %101, %96 : vector<1x128xf32>
    %103 = arith.mulf %102, %100 : vector<1x128xf32>
    %104 = arith.mulf %96, %74 : vector<1x128xf32>
    %105 = arith.addf %103, %104 : vector<1x128xf32>
    %c32_36 = arith.constant 32 : index
    %c0_37 = arith.constant 0 : index
    %106 = vector.load %arg1[%c32_36, %c0_37] : memref<296x384xf32, #tpu.memory_space<vmem>>, vector<128x256xf32>
    %c32_38 = arith.constant 32 : index
    %c256_39 = arith.constant 256 : index
    %107 = vector.load %arg1[%c32_38, %c256_39] : memref<296x384xf32, #tpu.memory_space<vmem>>, vector<128x128xf32>
    %cst_40 = arith.constant dense<0.000000e+00> : vector<1x256xf32>
    %108 = tpu.matmul %105, %106, %cst_40 {dimension_numbers = #tpu.dot_dimension_numbers<[1], [0], [0], [1], [0, 0, 1, 1], [], []>} : vector<1x128xf32>, vector<128x256xf32>, vector<1x256xf32> -> vector<1x256xf32>
    %cst_41 = arith.constant dense<0.000000e+00> : vector<1x128xf32>
    %109 = tpu.matmul %105, %107, %cst_41 {dimension_numbers = #tpu.dot_dimension_numbers<[1], [0], [0], [1], [0, 0, 1, 1], [], []>} : vector<1x128xf32>, vector<128x128xf32>, vector<1x128xf32> -> vector<1x128xf32>
    %110 = arith.addf %109, %6 : vector<1x128xf32>
    %111 = vector.extract_strided_slice %5 {offsets = [3, 0], sizes = [1, 384], strides = [1, 1]} : vector<8x384xf32> to vector<1x384xf32>
    %112 = vector.extract_strided_slice %111 {offsets = [0, 0], sizes = [1, 128], strides = [1, 1]} : vector<1x384xf32> to vector<1x128xf32>
    %113 = vector.extract_strided_slice %108 {offsets = [0, 0], sizes = [1, 128], strides = [1, 1]} : vector<1x256xf32> to vector<1x128xf32>
    %114 = arith.addf %112, %113 : vector<1x128xf32>
    %115 = arith.negf %114 : vector<1x128xf32>
    %116 = math.exp %115 : vector<1x128xf32>
    %cst_42 = arith.constant 1.000000e+00 : f32
    %117 = vector.broadcast %cst_42 : f32 to vector<1x128xf32>
    %118 = arith.addf %117, %116 : vector<1x128xf32>
    %119 = arith.divf %117, %118 : vector<1x128xf32>
    %120 = vector.extract_strided_slice %111 {offsets = [0, 128], sizes = [1, 128], strides = [1, 1]} : vector<1x384xf32> to vector<1x128xf32>
    %121 = vector.extract_strided_slice %108 {offsets = [0, 128], sizes = [1, 128], strides = [1, 1]} : vector<1x256xf32> to vector<1x128xf32>
    %122 = arith.addf %120, %121 : vector<1x128xf32>
    %123 = arith.negf %122 : vector<1x128xf32>
    %124 = math.exp %123 : vector<1x128xf32>
    %cst_43 = arith.constant 1.000000e+00 : f32
    %125 = vector.broadcast %cst_43 : f32 to vector<1x128xf32>
    %126 = arith.addf %125, %124 : vector<1x128xf32>
    %127 = arith.divf %125, %126 : vector<1x128xf32>
    %128 = vector.extract_strided_slice %111 {offsets = [0, 256], sizes = [1, 128], strides = [1, 1]} : vector<1x384xf32> to vector<1x128xf32>
    %129 = arith.mulf %119, %110 : vector<1x128xf32>
    %130 = arith.addf %128, %129 : vector<1x128xf32>
    %131 = math.tanh %130 : vector<1x128xf32>
    %cst_44 = arith.constant 1.000000e+00 : f32
    %132 = vector.broadcast %cst_44 : f32 to vector<1x128xf32>
    %133 = arith.subf %132, %127 : vector<1x128xf32>
    %134 = arith.mulf %133, %131 : vector<1x128xf32>
    %135 = arith.mulf %127, %105 : vector<1x128xf32>
    %136 = arith.addf %134, %135 : vector<1x128xf32>
    %c32_45 = arith.constant 32 : index
    %c0_46 = arith.constant 0 : index
    %137 = vector.load %arg1[%c32_45, %c0_46] : memref<296x384xf32, #tpu.memory_space<vmem>>, vector<128x256xf32>
    %c32_47 = arith.constant 32 : index
    %c256_48 = arith.constant 256 : index
    %138 = vector.load %arg1[%c32_47, %c256_48] : memref<296x384xf32, #tpu.memory_space<vmem>>, vector<128x128xf32>
    %cst_49 = arith.constant dense<0.000000e+00> : vector<1x256xf32>
    %139 = tpu.matmul %136, %137, %cst_49 {dimension_numbers = #tpu.dot_dimension_numbers<[1], [0], [0], [1], [0, 0, 1, 1], [], []>} : vector<1x128xf32>, vector<128x256xf32>, vector<1x256xf32> -> vector<1x256xf32>
    %cst_50 = arith.constant dense<0.000000e+00> : vector<1x128xf32>
    %140 = tpu.matmul %136, %138, %cst_50 {dimension_numbers = #tpu.dot_dimension_numbers<[1], [0], [0], [1], [0, 0, 1, 1], [], []>} : vector<1x128xf32>, vector<128x128xf32>, vector<1x128xf32> -> vector<1x128xf32>
    %141 = arith.addf %140, %6 : vector<1x128xf32>
    %142 = vector.extract_strided_slice %5 {offsets = [4, 0], sizes = [1, 384], strides = [1, 1]} : vector<8x384xf32> to vector<1x384xf32>
    %143 = vector.extract_strided_slice %142 {offsets = [0, 0], sizes = [1, 128], strides = [1, 1]} : vector<1x384xf32> to vector<1x128xf32>
    %144 = vector.extract_strided_slice %139 {offsets = [0, 0], sizes = [1, 128], strides = [1, 1]} : vector<1x256xf32> to vector<1x128xf32>
    %145 = arith.addf %143, %144 : vector<1x128xf32>
    %146 = arith.negf %145 : vector<1x128xf32>
    %147 = math.exp %146 : vector<1x128xf32>
    %cst_51 = arith.constant 1.000000e+00 : f32
    %148 = vector.broadcast %cst_51 : f32 to vector<1x128xf32>
    %149 = arith.addf %148, %147 : vector<1x128xf32>
    %150 = arith.divf %148, %149 : vector<1x128xf32>
    %151 = vector.extract_strided_slice %142 {offsets = [0, 128], sizes = [1, 128], strides = [1, 1]} : vector<1x384xf32> to vector<1x128xf32>
    %152 = vector.extract_strided_slice %139 {offsets = [0, 128], sizes = [1, 128], strides = [1, 1]} : vector<1x256xf32> to vector<1x128xf32>
    %153 = arith.addf %151, %152 : vector<1x128xf32>
    %154 = arith.negf %153 : vector<1x128xf32>
    %155 = math.exp %154 : vector<1x128xf32>
    %cst_52 = arith.constant 1.000000e+00 : f32
    %156 = vector.broadcast %cst_52 : f32 to vector<1x128xf32>
    %157 = arith.addf %156, %155 : vector<1x128xf32>
    %158 = arith.divf %156, %157 : vector<1x128xf32>
    %159 = vector.extract_strided_slice %142 {offsets = [0, 256], sizes = [1, 128], strides = [1, 1]} : vector<1x384xf32> to vector<1x128xf32>
    %160 = arith.mulf %150, %141 : vector<1x128xf32>
    %161 = arith.addf %159, %160 : vector<1x128xf32>
    %162 = math.tanh %161 : vector<1x128xf32>
    %cst_53 = arith.constant 1.000000e+00 : f32
    %163 = vector.broadcast %cst_53 : f32 to vector<1x128xf32>
    %164 = arith.subf %163, %158 : vector<1x128xf32>
    %165 = arith.mulf %164, %162 : vector<1x128xf32>
    %166 = arith.mulf %158, %136 : vector<1x128xf32>
    %167 = arith.addf %165, %166 : vector<1x128xf32>
    %c32_54 = arith.constant 32 : index
    %c0_55 = arith.constant 0 : index
    %168 = vector.load %arg1[%c32_54, %c0_55] : memref<296x384xf32, #tpu.memory_space<vmem>>, vector<128x256xf32>
    %c32_56 = arith.constant 32 : index
    %c256_57 = arith.constant 256 : index
    %169 = vector.load %arg1[%c32_56, %c256_57] : memref<296x384xf32, #tpu.memory_space<vmem>>, vector<128x128xf32>
    %cst_58 = arith.constant dense<0.000000e+00> : vector<1x256xf32>
    %170 = tpu.matmul %167, %168, %cst_58 {dimension_numbers = #tpu.dot_dimension_numbers<[1], [0], [0], [1], [0, 0, 1, 1], [], []>} : vector<1x128xf32>, vector<128x256xf32>, vector<1x256xf32> -> vector<1x256xf32>
    %cst_59 = arith.constant dense<0.000000e+00> : vector<1x128xf32>
    %171 = tpu.matmul %167, %169, %cst_59 {dimension_numbers = #tpu.dot_dimension_numbers<[1], [0], [0], [1], [0, 0, 1, 1], [], []>} : vector<1x128xf32>, vector<128x128xf32>, vector<1x128xf32> -> vector<1x128xf32>
    %172 = arith.addf %171, %6 : vector<1x128xf32>
    %173 = vector.extract_strided_slice %5 {offsets = [5, 0], sizes = [1, 384], strides = [1, 1]} : vector<8x384xf32> to vector<1x384xf32>
    %174 = vector.extract_strided_slice %173 {offsets = [0, 0], sizes = [1, 128], strides = [1, 1]} : vector<1x384xf32> to vector<1x128xf32>
    %175 = vector.extract_strided_slice %170 {offsets = [0, 0], sizes = [1, 128], strides = [1, 1]} : vector<1x256xf32> to vector<1x128xf32>
    %176 = arith.addf %174, %175 : vector<1x128xf32>
    %177 = arith.negf %176 : vector<1x128xf32>
    %178 = math.exp %177 : vector<1x128xf32>
    %cst_60 = arith.constant 1.000000e+00 : f32
    %179 = vector.broadcast %cst_60 : f32 to vector<1x128xf32>
    %180 = arith.addf %179, %178 : vector<1x128xf32>
    %181 = arith.divf %179, %180 : vector<1x128xf32>
    %182 = vector.extract_strided_slice %173 {offsets = [0, 128], sizes = [1, 128], strides = [1, 1]} : vector<1x384xf32> to vector<1x128xf32>
    %183 = vector.extract_strided_slice %170 {offsets = [0, 128], sizes = [1, 128], strides = [1, 1]} : vector<1x256xf32> to vector<1x128xf32>
    %184 = arith.addf %182, %183 : vector<1x128xf32>
    %185 = arith.negf %184 : vector<1x128xf32>
    %186 = math.exp %185 : vector<1x128xf32>
    %cst_61 = arith.constant 1.000000e+00 : f32
    %187 = vector.broadcast %cst_61 : f32 to vector<1x128xf32>
    %188 = arith.addf %187, %186 : vector<1x128xf32>
    %189 = arith.divf %187, %188 : vector<1x128xf32>
    %190 = vector.extract_strided_slice %173 {offsets = [0, 256], sizes = [1, 128], strides = [1, 1]} : vector<1x384xf32> to vector<1x128xf32>
    %191 = arith.mulf %181, %172 : vector<1x128xf32>
    %192 = arith.addf %190, %191 : vector<1x128xf32>
    %193 = math.tanh %192 : vector<1x128xf32>
    %cst_62 = arith.constant 1.000000e+00 : f32
    %194 = vector.broadcast %cst_62 : f32 to vector<1x128xf32>
    %195 = arith.subf %194, %189 : vector<1x128xf32>
    %196 = arith.mulf %195, %193 : vector<1x128xf32>
    %197 = arith.mulf %189, %167 : vector<1x128xf32>
    %198 = arith.addf %196, %197 : vector<1x128xf32>
    %c32_63 = arith.constant 32 : index
    %c0_64 = arith.constant 0 : index
    %199 = vector.load %arg1[%c32_63, %c0_64] : memref<296x384xf32, #tpu.memory_space<vmem>>, vector<128x256xf32>
    %c32_65 = arith.constant 32 : index
    %c256_66 = arith.constant 256 : index
    %200 = vector.load %arg1[%c32_65, %c256_66] : memref<296x384xf32, #tpu.memory_space<vmem>>, vector<128x128xf32>
    %cst_67 = arith.constant dense<0.000000e+00> : vector<1x256xf32>
    %201 = tpu.matmul %198, %199, %cst_67 {dimension_numbers = #tpu.dot_dimension_numbers<[1], [0], [0], [1], [0, 0, 1, 1], [], []>} : vector<1x128xf32>, vector<128x256xf32>, vector<1x256xf32> -> vector<1x256xf32>
    %cst_68 = arith.constant dense<0.000000e+00> : vector<1x128xf32>
    %202 = tpu.matmul %198, %200, %cst_68 {dimension_numbers = #tpu.dot_dimension_numbers<[1], [0], [0], [1], [0, 0, 1, 1], [], []>} : vector<1x128xf32>, vector<128x128xf32>, vector<1x128xf32> -> vector<1x128xf32>
    %203 = arith.addf %202, %6 : vector<1x128xf32>
    %204 = vector.extract_strided_slice %5 {offsets = [6, 0], sizes = [1, 384], strides = [1, 1]} : vector<8x384xf32> to vector<1x384xf32>
    %205 = vector.extract_strided_slice %204 {offsets = [0, 0], sizes = [1, 128], strides = [1, 1]} : vector<1x384xf32> to vector<1x128xf32>
    %206 = vector.extract_strided_slice %201 {offsets = [0, 0], sizes = [1, 128], strides = [1, 1]} : vector<1x256xf32> to vector<1x128xf32>
    %207 = arith.addf %205, %206 : vector<1x128xf32>
    %208 = arith.negf %207 : vector<1x128xf32>
    %209 = math.exp %208 : vector<1x128xf32>
    %cst_69 = arith.constant 1.000000e+00 : f32
    %210 = vector.broadcast %cst_69 : f32 to vector<1x128xf32>
    %211 = arith.addf %210, %209 : vector<1x128xf32>
    %212 = arith.divf %210, %211 : vector<1x128xf32>
    %213 = vector.extract_strided_slice %204 {offsets = [0, 128], sizes = [1, 128], strides = [1, 1]} : vector<1x384xf32> to vector<1x128xf32>
    %214 = vector.extract_strided_slice %201 {offsets = [0, 128], sizes = [1, 128], strides = [1, 1]} : vector<1x256xf32> to vector<1x128xf32>
    %215 = arith.addf %213, %214 : vector<1x128xf32>
    %216 = arith.negf %215 : vector<1x128xf32>
    %217 = math.exp %216 : vector<1x128xf32>
    %cst_70 = arith.constant 1.000000e+00 : f32
    %218 = vector.broadcast %cst_70 : f32 to vector<1x128xf32>
    %219 = arith.addf %218, %217 : vector<1x128xf32>
    %220 = arith.divf %218, %219 : vector<1x128xf32>
    %221 = vector.extract_strided_slice %204 {offsets = [0, 256], sizes = [1, 128], strides = [1, 1]} : vector<1x384xf32> to vector<1x128xf32>
    %222 = arith.mulf %212, %203 : vector<1x128xf32>
    %223 = arith.addf %221, %222 : vector<1x128xf32>
    %224 = math.tanh %223 : vector<1x128xf32>
    %cst_71 = arith.constant 1.000000e+00 : f32
    %225 = vector.broadcast %cst_71 : f32 to vector<1x128xf32>
    %226 = arith.subf %225, %220 : vector<1x128xf32>
    %227 = arith.mulf %226, %224 : vector<1x128xf32>
    %228 = arith.mulf %220, %198 : vector<1x128xf32>
    %229 = arith.addf %227, %228 : vector<1x128xf32>
    %c32_72 = arith.constant 32 : index
    %c0_73 = arith.constant 0 : index
    %230 = vector.load %arg1[%c32_72, %c0_73] : memref<296x384xf32, #tpu.memory_space<vmem>>, vector<128x256xf32>
    %c32_74 = arith.constant 32 : index
    %c256_75 = arith.constant 256 : index
    %231 = vector.load %arg1[%c32_74, %c256_75] : memref<296x384xf32, #tpu.memory_space<vmem>>, vector<128x128xf32>
    %cst_76 = arith.constant dense<0.000000e+00> : vector<1x256xf32>
    %232 = tpu.matmul %229, %230, %cst_76 {dimension_numbers = #tpu.dot_dimension_numbers<[1], [0], [0], [1], [0, 0, 1, 1], [], []>} : vector<1x128xf32>, vector<128x256xf32>, vector<1x256xf32> -> vector<1x256xf32>
    %cst_77 = arith.constant dense<0.000000e+00> : vector<1x128xf32>
    %233 = tpu.matmul %229, %231, %cst_77 {dimension_numbers = #tpu.dot_dimension_numbers<[1], [0], [0], [1], [0, 0, 1, 1], [], []>} : vector<1x128xf32>, vector<128x128xf32>, vector<1x128xf32> -> vector<1x128xf32>
    %234 = arith.addf %233, %6 : vector<1x128xf32>
    %235 = vector.extract_strided_slice %5 {offsets = [7, 0], sizes = [1, 384], strides = [1, 1]} : vector<8x384xf32> to vector<1x384xf32>
    %236 = vector.extract_strided_slice %235 {offsets = [0, 0], sizes = [1, 128], strides = [1, 1]} : vector<1x384xf32> to vector<1x128xf32>
    %237 = vector.extract_strided_slice %232 {offsets = [0, 0], sizes = [1, 128], strides = [1, 1]} : vector<1x256xf32> to vector<1x128xf32>
    %238 = arith.addf %236, %237 : vector<1x128xf32>
    %239 = arith.negf %238 : vector<1x128xf32>
    %240 = math.exp %239 : vector<1x128xf32>
    %cst_78 = arith.constant 1.000000e+00 : f32
    %241 = vector.broadcast %cst_78 : f32 to vector<1x128xf32>
    %242 = arith.addf %241, %240 : vector<1x128xf32>
    %243 = arith.divf %241, %242 : vector<1x128xf32>
    %244 = vector.extract_strided_slice %235 {offsets = [0, 128], sizes = [1, 128], strides = [1, 1]} : vector<1x384xf32> to vector<1x128xf32>
    %245 = vector.extract_strided_slice %232 {offsets = [0, 128], sizes = [1, 128], strides = [1, 1]} : vector<1x256xf32> to vector<1x128xf32>
    %246 = arith.addf %244, %245 : vector<1x128xf32>
    %247 = arith.negf %246 : vector<1x128xf32>
    %248 = math.exp %247 : vector<1x128xf32>
    %cst_79 = arith.constant 1.000000e+00 : f32
    %249 = vector.broadcast %cst_79 : f32 to vector<1x128xf32>
    %250 = arith.addf %249, %248 : vector<1x128xf32>
    %251 = arith.divf %249, %250 : vector<1x128xf32>
    %252 = vector.extract_strided_slice %235 {offsets = [0, 256], sizes = [1, 128], strides = [1, 1]} : vector<1x384xf32> to vector<1x128xf32>
    %253 = arith.mulf %243, %234 : vector<1x128xf32>
    %254 = arith.addf %252, %253 : vector<1x128xf32>
    %255 = math.tanh %254 : vector<1x128xf32>
    %cst_80 = arith.constant 1.000000e+00 : f32
    %256 = vector.broadcast %cst_80 : f32 to vector<1x128xf32>
    %257 = arith.subf %256, %251 : vector<1x128xf32>
    %258 = arith.mulf %257, %255 : vector<1x128xf32>
    %259 = arith.mulf %251, %229 : vector<1x128xf32>
    %260 = arith.addf %258, %259 : vector<1x128xf32>
    %c1 = arith.constant 1 : index
    %c0_81 = arith.constant 0 : index
    %261 = vector.load %arg2[%c1, %c0_81] : memref<2x128xf32, #tpu.memory_space<vmem>>, vector<1x128xf32>
    tpu.vector_store %arg2[%c1, %c0_81], %260 {strides = array<i32>} : memref<2x128xf32, #tpu.memory_space<vmem>>, vector<1x128xf32>,
    return
  }
}

</mosaic_0001>

<llo_original>
// kernel: decoder_rnn_forward.1
$region0: #{decoder_rnn_forward.1}
  #allocation0 [shape = 'u32[]', space=smem, size = 0x4, offset = 0x4, fixed_abs, tag = 'smem constant byte address 0x4 - core index']
  #allocation1 [shape = 'u32[144,128]{1,0:T(1,128)}', space=vmem, size = 0x12000, scoped, tag = 'internal scratch']
  %s0 = inlined_call_operand.hbm [shape: f32[8,32], index: 0, kind: input, shape index: {}]
  %s1 = inlined_call_operand.hbm [shape: f32[296,384], index: 1, kind: input, shape index: {}]
  %s2 = inlined_call_operand.vmem [shape: f32[2,128], index: 2, kind: output, shape index: {}]
  %s3 = sld [smem:[#allocation0]]
  $region26: #{decoder_rnn_forward.1} parent=0
    _
  %s5 = ssub.s32 1, %s3
  %s6 = scalar_select 0, %s5, %s3
  $region1: #{decoder_rnn_forward.1} parent=0
    #allocation2 [shape = 'u8[4096]{0}', space=vmem, size = 0x1000, scoped, tag = 'input window, operand 0, single buffered']
    #allocation3 [shape = 's32[1]{0}', space=sflag, size = 0x4, scoped, tag = 'scoped memory for decoder_rnn_forward.1']
    #allocation4 [shape = 'u8[454656]{0}', space=vmem, size = 0x6f000, scoped, tag = 'input window, operand 1, single buffered']
    #allocation5 [shape = 's32[1]{0}', space=sflag, size = 0x4, scoped, tag = 'scoped memory for decoder_rnn_forward.1']
    %7 = vsyncpa [#allocation3], 0
    %8 = vsyncpa [#allocation5], 0
    // Predicated region
    $region2: #{decoder_rnn_forward.1} parent=1 // pred_check
      _
    $region3: #{decoder_rnn_forward.1} parent=1 // pred_check_branch
      %10 = sbr.rel (0) target = $region5
    $region4: #{decoder_rnn_forward.1} parent=1 // pred_region
      %s12 = ssub.s32 128, 128
      %13 = vsyncadd [#allocation3], %s12
      %s15 = sshll.u32 [#allocation2], 4
      %s16 = int_to_ptr.vmem [resolvable:$true] %s15
      %18 = dma.hbm_to_vmem [thread:$0]  %s0, 128, %s16, [#allocation3]
    $region5: #{decoder_rnn_forward.1} parent=1 // pred_fallthru
      _
    // Predicated region
    $region6: #{decoder_rnn_forward.1} parent=1 // pred_check
      _
    $region7: #{decoder_rnn_forward.1} parent=1 // pred_check_branch
      %20 = sbr.rel (0) target = $region9
    $region8: #{decoder_rnn_forward.1} parent=1 // pred_region
      %s22 = ssub.s32 14208, 14208
      %23 = vsyncadd [#allocation5], %s22
      %s24 = sshll.u32 [#allocation4], 4
      %s25 = int_to_ptr.vmem [resolvable:$true] %s24
      %30 = dma.hbm_to_vmem [thread:$0]  %s1, 14208, %s25, [#allocation5], 384, 384, 24
    $region9: #{decoder_rnn_forward.1} parent=1 // pred_fallthru
      _
    // Predicated region
    $region10: #{decoder_rnn_forward.1} parent=1 // pred_check
      _
    $region11: #{decoder_rnn_forward.1} parent=1 // pred_check_branch
      %32 = sbr.rel (0) target = $region13
    $region12: #{decoder_rnn_forward.1} parent=1 // pred_region
      %33 = dma.done [#allocation3], 128
    $region13: #{decoder_rnn_forward.1} parent=1 // pred_fallthru
      _
    // Predicated region
    $region14: #{decoder_rnn_forward.1} parent=1 // pred_check
      _
    $region15: #{decoder_rnn_forward.1} parent=1 // pred_check_branch
      %35 = sbr.rel (0) target = $region17
    $region16: #{decoder_rnn_forward.1} parent=1 // pred_region
      %36 = dma.done [#allocation5], 14208
    $region17: #{decoder_rnn_forward.1} parent=1 // pred_fallthru
      _
    %v37 = vld [vmem:[#allocation2] sm:$0xff]
    %v38 = vld [vmem:[#allocation4] sm:$0xff]
    %v39 = vld [vmem:[#allocation4 + $0x8] sm:$0xff]
    %v40 = vld [vmem:[#allocation4 + $0x10] sm:$0xff]
    %v41 = vld [vmem:[#allocation4 + $0x18] sm:$0xff]
    %v42 = vld [vmem:[#allocation4 + $0x20] sm:$0xff]
    %v43 = vld [vmem:[#allocation4 + $0x28] sm:$0xff]
    %v44 = vld [vmem:[#allocation4 + $0x30] sm:$0xff]
    %v45 = vld [vmem:[#allocation4 + $0x38] sm:$0xff]
    %v46 = vld [vmem:[#allocation4 + $0x40] sm:$0xff]
    %v47 = vld [vmem:[#allocation4 + $0x48] sm:$0xff]
    %v48 = vld [vmem:[#allocation4 + $0x50] sm:$0xff]
    %v49 = vld [vmem:[#allocation4 + $0x58] sm:$0xff]
    %s50 = scalar_lea.vmem [#allocation4], 864
    %v51 = vld [vmem:[%s50] ss:$8 sm:$0x7]
    %v53 = vlaneseq
    %v54 = vshrl.u32 %v53, 7
    %v55 = vsub.s32 0, %v54
    %v56 = vrot.slane %v51, %v55
    %v57 = vlaneseq
    %v58 = vshrl.u32 %v57, 7
    %v59 = vsub.s32 1, %v58
    %v60 = vrot.slane %v51, %v59
    %v61 = vlaneseq
    %v62 = vshrl.u32 %v61, 7
    %v63 = vsub.s32 2, %v62
    %v64 = vrot.slane %v51, %v63
    %vm68 = vcmask 261120
    %v70 = vsel %vm68, %v37, 0
    %72 = vmatprep.subr.mxu0 %v39
    %73 = vmatpush1.msra.mxu0 %v38
    %74 = vmatprep.subr.mxu0 %v42
    %75 = vmatpush1.msra.mxu0 %v41
    %76 = vmatprep.subr.mxu0 %v45
    %77 = vmatpush1.msra.mxu0 %v44
    %78 = vmatprep.subr.mxu0 %v48
    %79 = vmatpush1.msra.mxu0 %v47
    %80 = vmatprep.subr.mxu0 0.0
    %81 = vmatpush1.msra.mxu0 0.0
    %82 = vmatprep.subr.mxu0 0.0
    %83 = vmatpush1.msra.mxu0 0.0
    %84 = vmatprep.subr.mxu0 0.0
    %85 = vmatpush1.msra.mxu0 0.0
    %86 = vmatprep.subr.mxu0 0.0
    %87 = vmatpush1.msra.mxu0 0.0
    %88 = vmatprep.subr.mxu0 0.0
    %89 = vmatpush1.msra.mxu0 0.0
    %90 = vmatprep.subr.mxu0 0.0
    %91 = vmatpush1.msra.mxu0 0.0
    %92 = vmatprep.subr.mxu0 0.0
    %93 = vmatpush1.msra.mxu0 0.0
    %94 = vmatprep.subr.mxu0 0.0
    %95 = vmatpush1.msra.mxu0 0.0
    %96 = vmatprep.subr.mxu0 0.0
    %97 = vmatpush1.msra.mxu0 0.0
    %98 = vmatprep.subr.mxu0 0.0
    %99 = vmatpush1.msra.mxu0 0.0
    %100 = vmatprep.subr.mxu0 0.0
    %101 = vmatpush1.msra.mxu0 0.0
    %102 = vmatprep.subr.mxu0 0.0
    %103 = vmatpush1.msra.mxu0 0.0
    %104 = vmatprep.subr.mxu0 0.0
    %105 = vmatpush1.msra.mxu0 0.0
    %106 = vmatprep.subr.mxu0 0.0
    %107 = vmatpush1.msra.mxu0 0.0
    %108 = vmatprep.subr.mxu0 0.0
    %109 = vmatpush1.msra.mxu0 0.0
    %110 = vmatprep.subr.mxu0 0.0
    %111 = vmatpush1.msra.mxu0 0.0
    %112 = vmatprep.subr.mxu0 0.0
    %113 = vmatpush1.msra.mxu0 0.0
    %114 = vmatprep.subr.mxu0 0.0
    %115 = vmatpush1.msra.mxu0 0.0
    %116 = vmatprep.subr.mxu0 0.0
    %117 = vmatpush1.msra.mxu0 0.0
    %118 = vmatprep.subr.mxu0 0.0
    %119 = vmatpush1.msra.mxu0 0.0
    %120 = vmatprep.subr.mxu0 0.0
    %121 = vmatpush1.msra.mxu0 0.0
    %122 = vmatprep.subr.mxu0 0.0
    %123 = vmatpush1.msra.mxu0 0.0
    %124 = vmatprep.subr.mxu0 0.0
    %125 = vmatpush1.msra.mxu0 0.0
    %126 = vmatprep.subr.mxu0 0.0
    %127 = vmatpush1.msra.mxu0 0.0
    %128 = vmatprep.subr.mxu0 0.0
    %129 = vmatpush1.msra.mxu0 0.0
    %130 = vmatprep.subr.mxu0 0.0
    %131 = vmatpush1.msra.mxu0 0.0
    %132 = vmatprep.subr.mxu0 0.0
    %133 = vmatpush1.msra.mxu0 0.0
    %134 = vmatprep.subr.mxu0 0.0
    %135 = vmatpush1.msra.mxu0 0.0
    %136 = vmatprep.mubr.f32.mxu0 0.0
    %137 = vmatmul.mubr.f32.gmra.mrb[0].mxu0 %v70
    %v138 = vpop.f32.mrb[0].mxu0
    %v139 = vadd.f32 %v56, %v138
    %v140 = vpop.f32.mrb[0].mxu0
    %v141 = vadd.f32 %v60, %v140
    %142 = vdwg.mxu0
    %143 = vmatprep.subr.mxu0 0.0
    %144 = vmatpush1.msra.mxu0 %v40
    %145 = vmatprep.subr.mxu0 0.0
    %146 = vmatpush1.msra.mxu0 %v43
    %147 = vmatprep.subr.mxu0 0.0
    %148 = vmatpush1.msra.mxu0 %v46
    %149 = vmatprep.subr.mxu0 0.0
    %150 = vmatpush1.msra.mxu0 %v49
    %151 = vmatprep.subr.mxu0 0.0
    %152 = vmatpush1.msra.mxu0 0.0
    %153 = vmatprep.subr.mxu0 0.0
    %154 = vmatpush1.msra.mxu0 0.0
    %155 = vmatprep.subr.mxu0 0.0
    %156 = vmatpush1.msra.mxu0 0.0
    %157 = vmatprep.subr.mxu0 0.0
    %158 = vmatpush1.msra.mxu0 0.0
    %159 = vmatprep.subr.mxu0 0.0
    %160 = vmatpush1.msra.mxu0 0.0
    %161 = vmatprep.subr.mxu0 0.0
    %162 = vmatpush1.msra.mxu0 0.0
    %163 = vmatprep.subr.mxu0 0.0
    %164 = vmatpush1.msra.mxu0 0.0
    %165 = vmatprep.subr.mxu0 0.0
    %166 = vmatpush1.msra.mxu0 0.0
    %167 = vmatprep.subr.mxu0 0.0
    %168 = vmatpush1.msra.mxu0 0.0
    %169 = vmatprep.subr.mxu0 0.0
    %170 = vmatpush1.msra.mxu0 0.0
    %171 = vmatprep.subr.mxu0 0.0
    %172 = vmatpush1.msra.mxu0 0.0
    %173 = vmatprep.subr.mxu0 0.0
    %174 = vmatpush1.msra.mxu0 0.0
    %175 = vmatprep.subr.mxu0 0.0
    %176 = vmatpush1.msra.mxu0 0.0
    %177 = vmatprep.subr.mxu0 0.0
    %178 = vmatpush1.msra.mxu0 0.0
    %179 = vmatprep.subr.mxu0 0.0
    %180 = vmatpush1.msra.mxu0 0.0
    %181 = vmatprep.subr.mxu0 0.0
    %182 = vmatpush1.msra.mxu0 0.0
    %183 = vmatprep.subr.mxu0 0.0
    %184 = vmatpush1.msra.mxu0 0.0
    %185 = vmatprep.subr.mxu0 0.0
    %186 = vmatpush1.msra.mxu0 0.0
    %187 = vmatprep.subr.mxu0 0.0
    %188 = vmatpush1.msra.mxu0 0.0
    %189 = vmatprep.subr.mxu0 0.0
    %190 = vmatpush1.msra.mxu0 0.0
    %191 = vmatprep.subr.mxu0 0.0
    %192 = vmatpush1.msra.mxu0 0.0
    %193 = vmatprep.subr.mxu0 0.0
    %194 = vmatpush1.msra.mxu0 0.0
    %195 = vmatprep.subr.mxu0 0.0
    %196 = vmatpush1.msra.mxu0 0.0
    %197 = vmatprep.subr.mxu0 0.0
    %198 = vmatpush1.msra.mxu0 0.0
    %199 = vmatprep.subr.mxu0 0.0
    %200 = vmatpush1.msra.mxu0 0.0
    %201 = vmatprep.subr.mxu0 0.0
    %202 = vmatpush1.msra.mxu0 0.0
    %203 = vmatprep.subr.mxu0 0.0
    %204 = vmatpush1.msra.mxu0 0.0
    %205 = vmatprep.subr.mxu0 0.0
    %206 = vmatpush1.msra.mxu0 0.0
    %207 = vmatprep.mubr.f32.mxu0 0.0
    %208 = vmatmul.mubr.f32.gmra.mrb[0].mxu0 %v70
    %v209 = vpop.f32.mrb[0].mxu0
    %v210 = vadd.f32 %v64, %v209
    %v211 = vpop.f32.mrb[0].mxu0
    %212 = vdwg.mxu0
    %v213 = vld [vmem:[#allocation4 + $0x361] ss:$0 sm:$0xff]
    %v214 = vld [vmem:[#allocation4 + $0x369] ss:$0 sm:$0xff]
    %v215 = vld [vmem:[#allocation4 + $0x60] sm:$0xff]
    %v216 = vld [vmem:[#allocation4 + $0x68] sm:$0xff]
    %v217 = vld [vmem:[#allocation4 + $0x78] sm:$0xff]
    %v218 = vld [vmem:[#allocation4 + $0x80] sm:$0xff]
    %v219 = vld [vmem:[#allocation4 + $0x90] sm:$0xff]
    %v220 = vld [vmem:[#allocation4 + $0x98] sm:$0xff]
    %v221 = vld [vmem:[#allocation4 + $0xa8] sm:$0xff]
    %v222 = vld [vmem:[#allocation4 + $0xb0] sm:$0xff]
    %v223 = vld [vmem:[#allocation4 + $0xc0] sm:$0xff]
    %v224 = vld [vmem:[#allocation4 + $0xc8] sm:$0xff]
    %v225 = vld [vmem:[#allocation4 + $0xd8] sm:$0xff]
    %v226 = vld [vmem:[#allocation4 + $0xe0] sm:$0xff]
    %v227 = vld [vmem:[#allocation4 + $0xf0] sm:$0xff]
    %v228 = vld [vmem:[#allocation4 + $0xf8] sm:$0xff]
    %v229 = vld [vmem:[#allocation4 + $0x108] sm:$0xff]
    %v230 = vld [vmem:[#allocation4 + $0x110] sm:$0xff]
    %v231 = vld [vmem:[#allocation4 + $0x120] sm:$0xff]
    %v232 = vld [vmem:[#allocation4 + $0x128] sm:$0xff]
    %v233 = vld [vmem:[#allocation4 + $0x138] sm:$0xff]
    %v234 = vld [vmem:[#allocation4 + $0x140] sm:$0xff]
    %v235 = vld [vmem:[#allocation4 + $0x150] sm:$0xff]
    %v236 = vld [vmem:[#allocation4 + $0x158] sm:$0xff]
    %v237 = vld [vmem:[#allocation4 + $0x168] sm:$0xff]
    %v238 = vld [vmem:[#allocation4 + $0x170] sm:$0xff]
    %v239 = vld [vmem:[#allocation4 + $0x180] sm:$0xff]
    %v240 = vld [vmem:[#allocation4 + $0x188] sm:$0xff]
    %v241 = vld [vmem:[#allocation4 + $0x198] sm:$0xff]
    %v242 = vld [vmem:[#allocation4 + $0x1a0] sm:$0xff]
    %v243 = vld [vmem:[#allocation4 + $0x1b0] sm:$0xff]
    %v244 = vld [vmem:[#allocation4 + $0x1b8] sm:$0xff]
    %v245 = vld [vmem:[#allocation4 + $0x1c8] sm:$0xff]
    %v246 = vld [vmem:[#allocation4 + $0x1d0] sm:$0xff]
    %v247 = vld [vmem:[#allocation4 + $0x70] sm:$0xff]
    %v248 = vld [vmem:[#allocation4 + $0x88] sm:$0xff]
    %v249 = vld [vmem:[#allocation4 + $0xa0] sm:$0xff]
    %v250 = vld [vmem:[#allocation4 + $0xb8] sm:$0xff]
    %v251 = vld [vmem:[#allocation4 + $0xd0] sm:$0xff]
    %v252 = vld [vmem:[#allocation4 + $0xe8] sm:$0xff]
    %v253 = vld [vmem:[#allocation4 + $0x100] sm:$0xff]
    %v254 = vld [vmem:[#allocation4 + $0x118] sm:$0xff]
    %v255 = vld [vmem:[#allocation4 + $0x130] sm:$0xff]
    %v256 = vld [vmem:[#allocation4 + $0x148] sm:$0xff]
    %v257 = vld [vmem:[#allocation4 + $0x160] sm:$0xff]
    %v258 = vld [vmem:[#allocation4 + $0x178] sm:$0xff]
    %v259 = vld [vmem:[#allocation4 + $0x190] sm:$0xff]
    %v260 = vld [vmem:[#allocation4 + $0x1a8] sm:$0xff]
    %v261 = vld [vmem:[#allocation4 + $0x1c0] sm:$0xff]
    %v262 = vld [vmem:[#allocation4 + $0x1d8] sm:$0xff]
    %263 = vmatprep.subr.mxu0 %v216
    %264 = vmatpush1.msra.mxu0 %v215
    %265 = vmatprep.subr.mxu0 %v218
    %266 = vmatpush1.msra.mxu0 %v217
    %267 = vmatprep.subr.mxu0 %v220
    %268 = vmatpush1.msra.mxu0 %v219
    %269 = vmatprep.subr.mxu0 %v222
    %270 = vmatpush1.msra.mxu0 %v221
    %271 = vmatprep.subr.mxu0 %v224
    %272 = vmatpush1.msra.mxu0 %v223
    %273 = vmatprep.subr.mxu0 %v226
    %274 = vmatpush1.msra.mxu0 %v225
    %275 = vmatprep.subr.mxu0 %v228
    %276 = vmatpush1.msra.mxu0 %v227
    %277 = vmatprep.subr.mxu0 %v230
    %278 = vmatpush1.msra.mxu0 %v229
    %279 = vmatprep.subr.mxu0 %v232
    %280 = vmatpush1.msra.mxu0 %v231
    %281 = vmatprep.subr.mxu0 %v234
    %282 = vmatpush1.msra.mxu0 %v233
    %283 = vmatprep.subr.mxu0 %v236
    %284 = vmatpush1.msra.mxu0 %v235
    %285 = vmatprep.subr.mxu0 %v238
    %286 = vmatpush1.msra.mxu0 %v237
    %287 = vmatprep.subr.mxu0 %v240
    %288 = vmatpush1.msra.mxu0 %v239
    %289 = vmatprep.subr.mxu0 %v242
    %290 = vmatpush1.msra.mxu0 %v241
    %291 = vmatprep.subr.mxu0 %v244
    %292 = vmatpush1.msra.mxu0 %v243
    %293 = vmatprep.subr.mxu0 %v246
    %294 = vmatpush1.msra.mxu0 %v245
    %295 = vmatprep.subr.mxu0 0.0
    %296 = vmatpush1.msra.mxu0 0.0
    %297 = vmatprep.subr.mxu0 0.0
    %298 = vmatpush1.msra.mxu0 0.0
    %299 = vmatprep.subr.mxu0 0.0
    %300 = vmatpush1.msra.mxu0 0.0
    %301 = vmatprep.subr.mxu0 0.0
    %302 = vmatpush1.msra.mxu0 0.0
    %303 = vmatprep.subr.mxu0 0.0
    %304 = vmatpush1.msra.mxu0 0.0
    %305 = vmatprep.subr.mxu0 0.0
    %306 = vmatpush1.msra.mxu0 0.0
    %307 = vmatprep.subr.mxu0 0.0
    %308 = vmatpush1.msra.mxu0 0.0
    %309 = vmatprep.subr.mxu0 0.0
    %310 = vmatpush1.msra.mxu0 0.0
    %311 = vmatprep.subr.mxu0 0.0
    %312 = vmatpush1.msra.mxu0 0.0
    %313 = vmatprep.subr.mxu0 0.0
    %314 = vmatpush1.msra.mxu0 0.0
    %315 = vmatprep.subr.mxu0 0.0
    %316 = vmatpush1.msra.mxu0 0.0
    %317 = vmatprep.subr.mxu0 0.0
    %318 = vmatpush1.msra.mxu0 0.0
    %319 = vmatprep.subr.mxu0 0.0
    %320 = vmatpush1.msra.mxu0 0.0
    %321 = vmatprep.subr.mxu0 0.0
    %322 = vmatpush1.msra.mxu0 0.0
    %323 = vmatprep.subr.mxu0 0.0
    %324 = vmatpush1.msra.mxu0 0.0
    %325 = vmatprep.subr.mxu0 0.0
    %326 = vmatpush1.msra.mxu0 0.0
    %327 = vmatprep.mubr.f32.mxu0 0.0
    %328 = vmatmul.mubr.f32.gmra.mrb[0].mxu0 0.0
    %v329 = vpop.f32.mrb[0].mxu0
    %v330 = vadd.f32 0.0, %v329
    %v331 = vpop.f32.mrb[0].mxu0
    %v332 = vadd.f32 0.0, %v331
    %333 = vdwg.mxu0
    %334 = vmatprep.subr.mxu0 0.0
    %335 = vmatpush1.msra.mxu0 %v247
    %336 = vmatprep.subr.mxu0 0.0
    %337 = vmatpush1.msra.mxu0 %v248
    %338 = vmatprep.subr.mxu0 0.0
    %339 = vmatpush1.msra.mxu0 %v249
    %340 = vmatprep.subr.mxu0 0.0
    %341 = vmatpush1.msra.mxu0 %v250
    %342 = vmatprep.subr.mxu0 0.0
    %343 = vmatpush1.msra.mxu0 %v251
    %344 = vmatprep.subr.mxu0 0.0
    %345 = vmatpush1.msra.mxu0 %v252
    %346 = vmatprep.subr.mxu0 0.0
    %347 = vmatpush1.msra.mxu0 %v253
    %348 = vmatprep.subr.mxu0 0.0
    %349 = vmatpush1.msra.mxu0 %v254
    %350 = vmatprep.subr.mxu0 0.0
    %351 = vmatpush1.msra.mxu0 %v255
    %352 = vmatprep.subr.mxu0 0.0
    %353 = vmatpush1.msra.mxu0 %v256
    %354 = vmatprep.subr.mxu0 0.0
    %355 = vmatpush1.msra.mxu0 %v257
    %356 = vmatprep.subr.mxu0 0.0
    %357 = vmatpush1.msra.mxu0 %v258
    %358 = vmatprep.subr.mxu0 0.0
    %359 = vmatpush1.msra.mxu0 %v259
    %360 = vmatprep.subr.mxu0 0.0
    %361 = vmatpush1.msra.mxu0 %v260
    %362 = vmatprep.subr.mxu0 0.0
    %363 = vmatpush1.msra.mxu0 %v261
    %364 = vmatprep.subr.mxu0 0.0
    %365 = vmatpush1.msra.mxu0 %v262
    %366 = vmatprep.subr.mxu0 0.0
    %367 = vmatpush1.msra.mxu0 0.0
    %368 = vmatprep.subr.mxu0 0.0
    %369 = vmatpush1.msra.mxu0 0.0
    %370 = vmatprep.subr.mxu0 0.0
    %371 = vmatpush1.msra.mxu0 0.0
    %372 = vmatprep.subr.mxu0 0.0
    %373 = vmatpush1.msra.mxu0 0.0
    %374 = vmatprep.subr.mxu0 0.0
    %375 = vmatpush1.msra.mxu0 0.0
    %376 = vmatprep.subr.mxu0 0.0
    %377 = vmatpush1.msra.mxu0 0.0
    %378 = vmatprep.subr.mxu0 0.0
    %379 = vmatpush1.msra.mxu0 0.0
    %380 = vmatprep.subr.mxu0 0.0
    %381 = vmatpush1.msra.mxu0 0.0
    %382 = vmatprep.subr.mxu0 0.0
    %383 = vmatpush1.msra.mxu0 0.0
    %384 = vmatprep.subr.mxu0 0.0
    %385 = vmatpush1.msra.mxu0 0.0
    %386 = vmatprep.subr.mxu0 0.0
    %387 = vmatpush1.msra.mxu0 0.0
    %388 = vmatprep.subr.mxu0 0.0
    %389 = vmatpush1.msra.mxu0 0.0
    %390 = vmatprep.subr.mxu0 0.0
    %391 = vmatpush1.msra.mxu0 0.0
    %392 = vmatprep.subr.mxu0 0.0
    %393 = vmatpush1.msra.mxu0 0.0
    %394 = vmatprep.subr.mxu0 0.0
    %395 = vmatpush1.msra.mxu0 0.0
    %396 = vmatprep.subr.mxu0 0.0
    %397 = vmatpush1.msra.mxu0 0.0
    %398 = vmatprep.mubr.f32.mxu0 0.0
    %399 = vmatmul.mubr.f32.gmra.mrb[0].mxu0 0.0
    %v400 = vpop.f32.mrb[0].mxu0
    %v401 = vadd.f32 %v213, %v400
    %v402 = vpop.f32.mrb[0].mxu0
    %403 = vdwg.mxu0
    %v404 = vadd.f32 %v139, %v330
    %v405 = vxor.u32 %v404, 2147483648
    %v406 = vmul.f32 %v405, 1.442695
    %v407 = vpow.pop %v406
    %v408 = vadd.f32 %v407, 1.0
    %v409 = vrcp.pop %v408
    %v410 = vmul.f32 1.0, %v409
    %v411 = vadd.f32 %v141, %v332
    %v412 = vxor.u32 %v411, 2147483648
    %v413 = vmul.f32 %v412, 1.442695
    %v414 = vpow.pop %v413
    %v415 = vadd.f32 %v414, 1.0
    %v416 = vrcp.pop %v415
    %v417 = vmul.f32 1.0, %v416
    %v418 = vmul.f32 %v410, %v401
    %v419 = vadd.f32 %v210, %v418
    %v420 = vtanh.pop %v419
    %v421 = vsub.f32 1.0, %v417
    %v422 = vmul.f32 %v421, %v420
    %v423 = vmul.f32 %v417, 0.0
    %v424 = vadd.f32 %v422, %v423
    %v425 = vld [vmem:[#allocation4 + $0x1e0] sm:$0xff]
    %v426 = vld [vmem:[#allocation4 + $0x1f8] sm:$0xff]
    %v427 = vld [vmem:[#allocation4 + $0x210] sm:$0xff]
    %v428 = vld [vmem:[#allocation4 + $0x228] sm:$0xff]
    %v429 = vld [vmem:[#allocation4 + $0x240] sm:$0xff]
    %v430 = vld [vmem:[#allocation4 + $0x258] sm:$0xff]
    %v431 = vld [vmem:[#allocation4 + $0x270] sm:$0xff]
    %v432 = vld [vmem:[#allocation4 + $0x288] sm:$0xff]
    %v433 = vld [vmem:[#allocation4 + $0x2a0] sm:$0xff]
    %v434 = vld [vmem:[#allocation4 + $0x2b8] sm:$0xff]
    %v435 = vld [vmem:[#allocation4 + $0x2d0] sm:$0xff]
    %v436 = vld [vmem:[#allocation4 + $0x2e8] sm:$0xff]
    %v437 = vld [vmem:[#allocation4 + $0x300] sm:$0xff]
    %v438 = vld [vmem:[#allocation4 + $0x318] sm:$0xff]
    %v439 = vld [vmem:[#allocation4 + $0x330] sm:$0xff]
    %v440 = vld [vmem:[#allocation4 + $0x348] sm:$0xff]
    %441 = vmatprep.subr.mxu0 0.0
    %442 = vmatpush1.msra.mxu0 %v425
    %443 = vmatprep.subr.mxu0 0.0
    %444 = vmatpush1.msra.mxu0 %v426
    %445 = vmatprep.subr.mxu0 0.0
    %446 = vmatpush1.msra.mxu0 %v427
    %447 = vmatprep.subr.mxu0 0.0
    %448 = vmatpush1.msra.mxu0 %v428
    %449 = vmatprep.subr.mxu0 0.0
    %450 = vmatpush1.msra.mxu0 %v429
    %451 = vmatprep.subr.mxu0 0.0
    %452 = vmatpush1.msra.mxu0 %v430
    %453 = vmatprep.subr.mxu0 0.0
    %454 = vmatpush1.msra.mxu0 %v431
    %455 = vmatprep.subr.mxu0 0.0
    %456 = vmatpush1.msra.mxu0 %v432
    %457 = vmatprep.subr.mxu0 0.0
    %458 = vmatpush1.msra.mxu0 %v433
    %459 = vmatprep.subr.mxu0 0.0
    %460 = vmatpush1.msra.mxu0 %v434
    %461 = vmatprep.subr.mxu0 0.0
    %462 = vmatpush1.msra.mxu0 %v435
    %463 = vmatprep.subr.mxu0 0.0
    %464 = vmatpush1.msra.mxu0 %v436
    %465 = vmatprep.subr.mxu0 0.0
    %466 = vmatpush1.msra.mxu0 %v437
    %467 = vmatprep.subr.mxu0 0.0
    %468 = vmatpush1.msra.mxu0 %v438
    %469 = vmatprep.subr.mxu0 0.0
    %470 = vmatpush1.msra.mxu0 %v439
    %471 = vmatprep.subr.mxu0 0.0
    %472 = vmatpush1.msra.mxu0 %v440
    %473 = vmatprep.subr.mxu0 0.0
    %474 = vmatpush1.msra.mxu0 0.0
    %475 = vmatprep.subr.mxu0 0.0
    %476 = vmatpush1.msra.mxu0 0.0
    %477 = vmatprep.subr.mxu0 0.0
    %478 = vmatpush1.msra.mxu0 0.0
    %479 = vmatprep.subr.mxu0 0.0
    %480 = vmatpush1.msra.mxu0 0.0
    %481 = vmatprep.subr.mxu0 0.0
    %482 = vmatpush1.msra.mxu0 0.0
    %483 = vmatprep.subr.mxu0 0.0
    %484 = vmatpush1.msra.mxu0 0.0
    %485 = vmatprep.subr.mxu0 0.0
    %486 = vmatpush1.msra.mxu0 0.0
    %487 = vmatprep.subr.mxu0 0.0
    %488 = vmatpush1.msra.mxu0 0.0
    %489 = vmatprep.subr.mxu0 0.0
    %490 = vmatpush1.msra.mxu0 0.0
    %491 = vmatprep.subr.mxu0 0.0
    %492 = vmatpush1.msra.mxu0 0.0
    %493 = vmatprep.subr.mxu0 0.0
    %494 = vmatpush1.msra.mxu0 0.0
    %495 = vmatprep.subr.mxu0 0.0
    %496 = vmatpush1.msra.mxu0 0.0
    %497 = vmatprep.subr.mxu0 0.0
    %498 = vmatpush1.msra.mxu0 0.0
    %499 = vmatprep.subr.mxu0 0.0
    %500 = vmatpush1.msra.mxu0 0.0
    %501 = vmatprep.subr.mxu0 0.0
    %502 = vmatpush1.msra.mxu0 0.0
    %503 = vmatprep.subr.mxu0 0.0
    %504 = vmatpush1.msra.mxu0 0.0
    %505 = vmatprep.mubr.f32.mxu0 0.0
    %506 = vmatmul.mubr.f32.gmra.mrb[0].mxu0 %v424
    %v507 = vpop.f32.mrb[0].mxu0
    %v508 = vadd.f32 %v214, %v507
    %v509 = vpop.f32.mrb[0].mxu0
    %510 = vdwg.mxu0
    %511 = vst [vmem:[%s2] sm:$0x1] %v508
    %v512 = vld [vmem:[#allocation4 + $0x60] sm:$0xff]
    %v513 = vld [vmem:[#allocation4 + $0x68] sm:$0xff]
    %v514 = vld [vmem:[#allocation4 + $0x78] sm:$0xff]
    %v515 = vld [vmem:[#allocation4 + $0x80] sm:$0xff]
    %v516 = vld [vmem:[#allocation4 + $0x90] sm:$0xff]
    %v517 = vld [vmem:[#allocation4 + $0x98] sm:$0xff]
    %v518 = vld [vmem:[#allocation4 + $0xa8] sm:$0xff]
    %v519 = vld [vmem:[#allocation4 + $0xb0] sm:$0xff]
    %v520 = vld [vmem:[#allocation4 + $0xc0] sm:$0xff]
    %v521 = vld [vmem:[#allocation4 + $0xc8] sm:$0xff]
    %v522 = vld [vmem:[#allocation4 + $0xd8] sm:$0xff]
    %v523 = vld [vmem:[#allocation4 + $0xe0] sm:$0xff]
    %v524 = vld [vmem:[#allocation4 + $0xf0] sm:$0xff]
    %v525 = vld [vmem:[#allocation4 + $0xf8] sm:$0xff]
    %v526 = vld [vmem:[#allocation4 + $0x108] sm:$0xff]
    %v527 = vld [vmem:[#allocation4 + $0x110] sm:$0xff]
    %v528 = vld [vmem:[#allocation4 + $0x120] sm:$0xff]
    %v529 = vld [vmem:[#allocation4 + $0x128] sm:$0xff]
    %v530 = vld [vmem:[#allocation4 + $0x138] sm:$0xff]
    %v531 = vld [vmem:[#allocation4 + $0x140] sm:$0xff]
    %v532 = vld [vmem:[#allocation4 + $0x150] sm:$0xff]
    %v533 = vld [vmem:[#allocation4 + $0x158] sm:$0xff]
    %v534 = vld [vmem:[#allocation4 + $0x168] sm:$0xff]
    %v535 = vld [vmem:[#allocation4 + $0x170] sm:$0xff]
    %v536 = vld [vmem:[#allocation4 + $0x180] sm:$0xff]
    %v537 = vld [vmem:[#allocation4 + $0x188] sm:$0xff]
    %v538 = vld [vmem:[#allocation4 + $0x198] sm:$0xff]
    %v539 = vld [vmem:[#allocation4 + $0x1a0] sm:$0xff]
    %v540 = vld [vmem:[#allocation4 + $0x1b0] sm:$0xff]
    %v541 = vld [vmem:[#allocation4 + $0x1b8] sm:$0xff]
    %v542 = vld [vmem:[#allocation4 + $0x1c8] sm:$0xff]
    %v543 = vld [vmem:[#allocation4 + $0x1d0] sm:$0xff]
    %v544 = vld [vmem:[#allocation4 + $0x70] sm:$0xff]
    %v545 = vld [vmem:[#allocation4 + $0x88] sm:$0xff]
    %v546 = vld [vmem:[#allocation4 + $0xa0] sm:$0xff]
    %v547 = vld [vmem:[#allocation4 + $0xb8] sm:$0xff]
    %v548 = vld [vmem:[#allocation4 + $0xd0] sm:$0xff]
    %v549 = vld [vmem:[#allocation4 + $0xe8] sm:$0xff]
    %v550 = vld [vmem:[#allocation4 + $0x100] sm:$0xff]
    %v551 = vld [vmem:[#allocation4 + $0x118] sm:$0xff]
    %v552 = vld [vmem:[#allocation4 + $0x130] sm:$0xff]
    %v553 = vld [vmem:[#allocation4 + $0x148] sm:$0xff]
    %v554 = vld [vmem:[#allocation4 + $0x160] sm:$0xff]
    %v555 = vld [vmem:[#allocation4 + $0x178] sm:$0xff]
    %v556 = vld [vmem:[#allocation4 + $0x190] sm:$0xff]
    %v557 = vld [vmem:[#allocation4 + $0x1a8] sm:$0xff]
    %v558 = vld [vmem:[#allocation4 + $0x1c0] sm:$0xff]
    %v559 = vld [vmem:[#allocation4 + $0x1d8] sm:$0xff]
    %560 = vmatprep.subr.mxu0 %v513
    %561 = vmatpush1.msra.mxu0 %v512
    %562 = vmatprep.subr.mxu0 %v515
    %563 = vmatpush1.msra.mxu0 %v514
    %564 = vmatprep.subr.mxu0 %v517
    %565 = vmatpush1.msra.mxu0 %v516
    %566 = vmatprep.subr.mxu0 %v519
    %567 = vmatpush1.msra.mxu0 %v518
    %568 = vmatprep.subr.mxu0 %v521
    %569 = vmatpush1.msra.mxu0 %v520
    %570 = vmatprep.subr.mxu0 %v523
    %571 = vmatpush1.msra.mxu0 %v522
    %572 = vmatprep.subr.mxu0 %v525
    %573 = vmatpush1.msra.mxu0 %v524
    %574 = vmatprep.subr.mxu0 %v527
    %575 = vmatpush1.msra.mxu0 %v526
    %576 = vmatprep.subr.mxu0 %v529
    %577 = vmatpush1.msra.mxu0 %v528
    %578 = vmatprep.subr.mxu0 %v531
    %579 = vmatpush1.msra.mxu0 %v530
    %580 = vmatprep.subr.mxu0 %v533
    %581 = vmatpush1.msra.mxu0 %v532
    %582 = vmatprep.subr.mxu0 %v535
    %583 = vmatpush1.msra.mxu0 %v534
    %584 = vmatprep.subr.mxu0 %v537
    %585 = vmatpush1.msra.mxu0 %v536
    %586 = vmatprep.subr.mxu0 %v539
    %587 = vmatpush1.msra.mxu0 %v538
    %588 = vmatprep.subr.mxu0 %v541
    %589 = vmatpush1.msra.mxu0 %v540
    %590 = vmatprep.subr.mxu0 %v543
    %591 = vmatpush1.msra.mxu0 %v542
    %592 = vmatprep.subr.mxu0 0.0
    %593 = vmatpush1.msra.mxu0 0.0
    %594 = vmatprep.subr.mxu0 0.0
    %595 = vmatpush1.msra.mxu0 0.0
    %596 = vmatprep.subr.mxu0 0.0
    %597 = vmatpush1.msra.mxu0 0.0
    %598 = vmatprep.subr.mxu0 0.0
    %599 = vmatpush1.msra.mxu0 0.0
    %600 = vmatprep.subr.mxu0 0.0
    %601 = vmatpush1.msra.mxu0 0.0
    %602 = vmatprep.subr.mxu0 0.0
    %603 = vmatpush1.msra.mxu0 0.0
    %604 = vmatprep.subr.mxu0 0.0
    %605 = vmatpush1.msra.mxu0 0.0
    %606 = vmatprep.subr.mxu0 0.0
    %607 = vmatpush1.msra.mxu0 0.0
    %608 = vmatprep.subr.mxu0 0.0
    %609 = vmatpush1.msra.mxu0 0.0
    %610 = vmatprep.subr.mxu0 0.0
    %611 = vmatpush1.msra.mxu0 0.0
    %612 = vmatprep.subr.mxu0 0.0
    %613 = vmatpush1.msra.mxu0 0.0
    %614 = vmatprep.subr.mxu0 0.0
    %615 = vmatpush1.msra.mxu0 0.0
    %616 = vmatprep.subr.mxu0 0.0
    %617 = vmatpush1.msra.mxu0 0.0
    %618 = vmatprep.subr.mxu0 0.0
    %619 = vmatpush1.msra.mxu0 0.0
    %620 = vmatprep.subr.mxu0 0.0
    %621 = vmatpush1.msra.mxu0 0.0
    %622 = vmatprep.subr.mxu0 0.0
    %623 = vmatpush1.msra.mxu0 0.0
    %624 = vmatprep.mubr.f32.mxu0 0.0
    %625 = vmatmul.mubr.f32.gmra.mrb[0].mxu0 %v424
    %v626 = vpop.f32.mrb[0].mxu0
    %v627 = vadd.f32 0.0, %v626
    %v628 = vpop.f32.mrb[0].mxu0
    %v629 = vadd.f32 0.0, %v628
    %630 = vdwg.mxu0
    %631 = vmatprep.subr.mxu0 0.0
    %632 = vmatpush1.msra.mxu0 %v544
    %633 = vmatprep.subr.mxu0 0.0
    %634 = vmatpush1.msra.mxu0 %v545
    %635 = vmatprep.subr.mxu0 0.0
    %636 = vmatpush1.msra.mxu0 %v546
    %637 = vmatprep.subr.mxu0 0.0
    %638 = vmatpush1.msra.mxu0 %v547
    %639 = vmatprep.subr.mxu0 0.0
    %640 = vmatpush1.msra.mxu0 %v548
    %641 = vmatprep.subr.mxu0 0.0
    %642 = vmatpush1.msra.mxu0 %v549
    %643 = vmatprep.subr.mxu0 0.0
    %644 = vmatpush1.msra.mxu0 %v550
    %645 = vmatprep.subr.mxu0 0.0
    %646 = vmatpush1.msra.mxu0 %v551
    %647 = vmatprep.subr.mxu0 0.0
    %648 = vmatpush1.msra.mxu0 %v552
    %649 = vmatprep.subr.mxu0 0.0
    %650 = vmatpush1.msra.mxu0 %v553
    %651 = vmatprep.subr.mxu0 0.0
    %652 = vmatpush1.msra.mxu0 %v554
    %653 = vmatprep.subr.mxu0 0.0
    %654 = vmatpush1.msra.mxu0 %v555
    %655 = vmatprep.subr.mxu0 0.0
    %656 = vmatpush1.msra.mxu0 %v556
    %657 = vmatprep.subr.mxu0 0.0
    %658 = vmatpush1.msra.mxu0 %v557
    %659 = vmatprep.subr.mxu0 0.0
    %660 = vmatpush1.msra.mxu0 %v558
    %661 = vmatprep.subr.mxu0 0.0
    %662 = vmatpush1.msra.mxu0 %v559
    %663 = vmatprep.subr.mxu0 0.0
    %664 = vmatpush1.msra.mxu0 0.0
    %665 = vmatprep.subr.mxu0 0.0
    %666 = vmatpush1.msra.mxu0 0.0
    %667 = vmatprep.subr.mxu0 0.0
    %668 = vmatpush1.msra.mxu0 0.0
    %669 = vmatprep.subr.mxu0 0.0
    %670 = vmatpush1.msra.mxu0 0.0
    %671 = vmatprep.subr.mxu0 0.0
    %672 = vmatpush1.msra.mxu0 0.0
    %673 = vmatprep.subr.mxu0 0.0
    %674 = vmatpush1.msra.mxu0 0.0
    %675 = vmatprep.subr.mxu0 0.0
    %676 = vmatpush1.msra.mxu0 0.0
    %677 = vmatprep.subr.mxu0 0.0
    %678 = vmatpush1.msra.mxu0 0.0
    %679 = vmatprep.subr.mxu0 0.0
    %680 = vmatpush1.msra.mxu0 0.0
    %681 = vmatprep.subr.mxu0 0.0
    %682 = vmatpush1.msra.mxu0 0.0
    %683 = vmatprep.subr.mxu0 0.0
    %684 = vmatpush1.msra.mxu0 0.0
    %685 = vmatprep.subr.mxu0 0.0
    %686 = vmatpush1.msra.mxu0 0.0
    %687 = vmatprep.subr.mxu0 0.0
    %688 = vmatpush1.msra.mxu0 0.0
    %689 = vmatprep.subr.mxu0 0.0
    %690 = vmatpush1.msra.mxu0 0.0
    %691 = vmatprep.subr.mxu0 0.0
    %692 = vmatpush1.msra.mxu0 0.0
    %693 = vmatprep.subr.mxu0 0.0
    %694 = vmatpush1.msra.mxu0 0.0
    %695 = vmatprep.mubr.f32.mxu0 0.0
    %696 = vmatmul.mubr.f32.gmra.mrb[0].mxu0 %v424
    %v697 = vpop.f32.mrb[0].mxu0
    %v698 = vadd.f32 %v213, %v697
    %v699 = vpop.f32.mrb[0].mxu0
    %700 = vdwg.mxu0
    %v702 = vrot.slane %v627, 7
    %v704 = vadd.f32 %v139, %v702
    %v705 = vxor.u32 %v704, 2147483648
    %v706 = vmul.f32 %v705, 1.442695
    %v707 = vpow.pop %v706
    %v708 = vadd.f32 %v707, 1.0
    %v709 = vrcp.pop %v708
    %v710 = vmul.f32 1.0, %v709
    %v712 = vrot.slane %v629, 7
    %v714 = vadd.f32 %v141, %v712
    %v715 = vxor.u32 %v714, 2147483648
    %v716 = vmul.f32 %v715, 1.442695
    %v717 = vpow.pop %v716
    %v718 = vadd.f32 %v717, 1.0
    %v719 = vrcp.pop %v718
    %v720 = vmul.f32 1.0, %v719
    %v722 = vrot.slane %v698, 7
    %v724 = vmul.f32 %v710, %v722
    %v725 = vadd.f32 %v210, %v724
    %v726 = vtanh.pop %v725
    %v727 = vsub.f32 1.0, %v720
    %v728 = vmul.f32 %v727, %v726
    %v730 = vrot.slane %v424, 7
    %v732 = vmul.f32 %v720, %v730
    %v733 = vadd.f32 %v728, %v732
    %v735 = vrot.slane %v733, 1
    %737 = vmatprep.subr.mxu0 %v513
    %738 = vmatpush1.msra.mxu0 %v512
    %739 = vmatprep.subr.mxu0 %v515
    %740 = vmatpush1.msra.mxu0 %v514
    %741 = vmatprep.subr.mxu0 %v517
    %742 = vmatpush1.msra.mxu0 %v516
    %743 = vmatprep.subr.mxu0 %v519
    %744 = vmatpush1.msra.mxu0 %v518
    %745 = vmatprep.subr.mxu0 %v521
    %746 = vmatpush1.msra.mxu0 %v520
    %747 = vmatprep.subr.mxu0 %v523
    %748 = vmatpush1.msra.mxu0 %v522
    %749 = vmatprep.subr.mxu0 %v525
    %750 = vmatpush1.msra.mxu0 %v524
    %751 = vmatprep.subr.mxu0 %v527
    %752 = vmatpush1.msra.mxu0 %v526
    %753 = vmatprep.subr.mxu0 %v529
    %754 = vmatpush1.msra.mxu0 %v528
    %755 = vmatprep.subr.mxu0 %v531
    %756 = vmatpush1.msra.mxu0 %v530
    %757 = vmatprep.subr.mxu0 %v533
    %758 = vmatpush1.msra.mxu0 %v532
    %759 = vmatprep.subr.mxu0 %v535
    %760 = vmatpush1.msra.mxu0 %v534
    %761 = vmatprep.subr.mxu0 %v537
    %762 = vmatpush1.msra.mxu0 %v536
    %763 = vmatprep.subr.mxu0 %v539
    %764 = vmatpush1.msra.mxu0 %v538
    %765 = vmatprep.subr.mxu0 %v541
    %766 = vmatpush1.msra.mxu0 %v540
    %767 = vmatprep.subr.mxu0 %v543
    %768 = vmatpush1.msra.mxu0 %v542
    %769 = vmatprep.subr.mxu0 0.0
    %770 = vmatpush1.msra.mxu0 0.0
    %771 = vmatprep.subr.mxu0 0.0
    %772 = vmatpush1.msra.mxu0 0.0
    %773 = vmatprep.subr.mxu0 0.0
    %774 = vmatpush1.msra.mxu0 0.0
    %775 = vmatprep.subr.mxu0 0.0
    %776 = vmatpush1.msra.mxu0 0.0
    %777 = vmatprep.subr.mxu0 0.0
    %778 = vmatpush1.msra.mxu0 0.0
    %779 = vmatprep.subr.mxu0 0.0
    %780 = vmatpush1.msra.mxu0 0.0
    %781 = vmatprep.subr.mxu0 0.0
    %782 = vmatpush1.msra.mxu0 0.0
    %783 = vmatprep.subr.mxu0 0.0
    %784 = vmatpush1.msra.mxu0 0.0
    %785 = vmatprep.subr.mxu0 0.0
    %786 = vmatpush1.msra.mxu0 0.0
    %787 = vmatprep.subr.mxu0 0.0
    %788 = vmatpush1.msra.mxu0 0.0
    %789 = vmatprep.subr.mxu0 0.0
    %790 = vmatpush1.msra.mxu0 0.0
    %791 = vmatprep.subr.mxu0 0.0
    %792 = vmatpush1.msra.mxu0 0.0
    %793 = vmatprep.subr.mxu0 0.0
    %794 = vmatpush1.msra.mxu0 0.0
    %795 = vmatprep.subr.mxu0 0.0
    %796 = vmatpush1.msra.mxu0 0.0
    %797 = vmatprep.subr.mxu0 0.0
    %798 = vmatpush1.msra.mxu0 0.0
    %799 = vmatprep.subr.mxu0 0.0
    %800 = vmatpush1.msra.mxu0 0.0
    %801 = vmatprep.mubr.f32.mxu0 0.0
    %802 = vmatmul.mubr.f32.gmra.mrb[0].mxu0 %v735
    %v803 = vpop.f32.mrb[0].mxu0
    %v804 = vadd.f32 0.0, %v803
    %v805 = vpop.f32.mrb[0].mxu0
    %v806 = vadd.f32 0.0, %v805
    %807 = vdwg.mxu0
    %808 = vmatprep.subr.mxu0 0.0
    %809 = vmatpush1.msra.mxu0 %v544
    %810 = vmatprep.subr.mxu0 0.0
    %811 = vmatpush1.msra.mxu0 %v545
    %812 = vmatprep.subr.mxu0 0.0
    %813 = vmatpush1.msra.mxu0 %v546
    %814 = vmatprep.subr.mxu0 0.0
    %815 = vmatpush1.msra.mxu0 %v547
    %816 = vmatprep.subr.mxu0 0.0
    %817 = vmatpush1.msra.mxu0 %v548
    %818 = vmatprep.subr.mxu0 0.0
    %819 = vmatpush1.msra.mxu0 %v549
    %820 = vmatprep.subr.mxu0 0.0
    %821 = vmatpush1.msra.mxu0 %v550
    %822 = vmatprep.subr.mxu0 0.0
    %823 = vmatpush1.msra.mxu0 %v551
    %824 = vmatprep.subr.mxu0 0.0
    %825 = vmatpush1.msra.mxu0 %v552
    %826 = vmatprep.subr.mxu0 0.0
    %827 = vmatpush1.msra.mxu0 %v553
    %828 = vmatprep.subr.mxu0 0.0
    %829 = vmatpush1.msra.mxu0 %v554
    %830 = vmatprep.subr.mxu0 0.0
    %831 = vmatpush1.msra.mxu0 %v555
    %832 = vmatprep.subr.mxu0 0.0
    %833 = vmatpush1.msra.mxu0 %v556
    %834 = vmatprep.subr.mxu0 0.0
    %835 = vmatpush1.msra.mxu0 %v557
    %836 = vmatprep.subr.mxu0 0.0
    %837 = vmatpush1.msra.mxu0 %v558
    %838 = vmatprep.subr.mxu0 0.0
    %839 = vmatpush1.msra.mxu0 %v559
    %840 = vmatprep.subr.mxu0 0.0
    %841 = vmatpush1.msra.mxu0 0.0
    %842 = vmatprep.subr.mxu0 0.0
    %843 = vmatpush1.msra.mxu0 0.0
    %844 = vmatprep.subr.mxu0 0.0
    %845 = vmatpush1.msra.mxu0 0.0
    %846 = vmatprep.subr.mxu0 0.0
    %847 = vmatpush1.msra.mxu0 0.0
    %848 = vmatprep.subr.mxu0 0.0
    %849 = vmatpush1.msra.mxu0 0.0
    %850 = vmatprep.subr.mxu0 0.0
    %851 = vmatpush1.msra.mxu0 0.0
    %852 = vmatprep.subr.mxu0 0.0
    %853 = vmatpush1.msra.mxu0 0.0
    %854 = vmatprep.subr.mxu0 0.0
    %855 = vmatpush1.msra.mxu0 0.0
    %856 = vmatprep.subr.mxu0 0.0
    %857 = vmatpush1.msra.mxu0 0.0
    %858 = vmatprep.subr.mxu0 0.0
    %859 = vmatpush1.msra.mxu0 0.0
    %860 = vmatprep.subr.mxu0 0.0
    %861 = vmatpush1.msra.mxu0 0.0
    %862 = vmatprep.subr.mxu0 0.0
    %863 = vmatpush1.msra.mxu0 0.0
    %864 = vmatprep.subr.mxu0 0.0
    %865 = vmatpush1.msra.mxu0 0.0
    %866 = vmatprep.subr.mxu0 0.0
    %867 = vmatpush1.msra.mxu0 0.0
    %868 = vmatprep.subr.mxu0 0.0
    %869 = vmatpush1.msra.mxu0 0.0
    %870 = vmatprep.subr.mxu0 0.0
    %871 = vmatpush1.msra.mxu0 0.0
    %872 = vmatprep.mubr.f32.mxu0 0.0
    %873 = vmatmul.mubr.f32.gmra.mrb[0].mxu0 %v735
    %v874 = vpop.f32.mrb[0].mxu0
    %v875 = vadd.f32 %v213, %v874
    %v876 = vpop.f32.mrb[0].mxu0
    %877 = vdwg.mxu0
    %v879 = vrot.slane %v804, 6
    %v881 = vadd.f32 %v139, %v879
    %v882 = vxor.u32 %v881, 2147483648
    %v883 = vmul.f32 %v882, 1.442695
    %v884 = vpow.pop %v883
    %v885 = vadd.f32 %v884, 1.0
    %v886 = vrcp.pop %v885
    %v887 = vmul.f32 1.0, %v886
    %v889 = vrot.slane %v806, 6
    %v891 = vadd.f32 %v141, %v889
    %v892 = vxor.u32 %v891, 2147483648
    %v893 = vmul.f32 %v892, 1.442695
    %v894 = vpow.pop %v893
    %v895 = vadd.f32 %v894, 1.0
    %v896 = vrcp.pop %v895
    %v897 = vmul.f32 1.0, %v896
    %v899 = vrot.slane %v875, 6
    %v901 = vmul.f32 %v887, %v899
    %v902 = vadd.f32 %v210, %v901
    %v903 = vtanh.pop %v902
    %v904 = vsub.f32 1.0, %v897
    %v905 = vmul.f32 %v904, %v903
    %v906 = vrot.slane %v733, 7
    %v908 = vmul.f32 %v897, %v906
    %v909 = vadd.f32 %v905, %v908
    %v911 = vrot.slane %v909, 2
    %913 = vmatprep.subr.mxu0 %v513
    %914 = vmatpush1.msra.mxu0 %v512
    %915 = vmatprep.subr.mxu0 %v515
    %916 = vmatpush1.msra.mxu0 %v514
    %917 = vmatprep.subr.mxu0 %v517
    %918 = vmatpush1.msra.mxu0 %v516
    %919 = vmatprep.subr.mxu0 %v519
    %920 = vmatpush1.msra.mxu0 %v518
    %921 = vmatprep.subr.mxu0 %v521
    %922 = vmatpush1.msra.mxu0 %v520
    %923 = vmatprep.subr.mxu0 %v523
    %924 = vmatpush1.msra.mxu0 %v522
    %925 = vmatprep.subr.mxu0 %v525
    %926 = vmatpush1.msra.mxu0 %v524
    %927 = vmatprep.subr.mxu0 %v527
    %928 = vmatpush1.msra.mxu0 %v526
    %929 = vmatprep.subr.mxu0 %v529
    %930 = vmatpush1.msra.mxu0 %v528
    %931 = vmatprep.subr.mxu0 %v531
    %932 = vmatpush1.msra.mxu0 %v530
    %933 = vmatprep.subr.mxu0 %v533
    %934 = vmatpush1.msra.mxu0 %v532
    %935 = vmatprep.subr.mxu0 %v535
    %936 = vmatpush1.msra.mxu0 %v534
    %937 = vmatprep.subr.mxu0 %v537
    %938 = vmatpush1.msra.mxu0 %v536
    %939 = vmatprep.subr.mxu0 %v539
    %940 = vmatpush1.msra.mxu0 %v538
    %941 = vmatprep.subr.mxu0 %v541
    %942 = vmatpush1.msra.mxu0 %v540
    %943 = vmatprep.subr.mxu0 %v543
    %944 = vmatpush1.msra.mxu0 %v542
    %945 = vmatprep.subr.mxu0 0.0
    %946 = vmatpush1.msra.mxu0 0.0
    %947 = vmatprep.subr.mxu0 0.0
    %948 = vmatpush1.msra.mxu0 0.0
    %949 = vmatprep.subr.mxu0 0.0
    %950 = vmatpush1.msra.mxu0 0.0
    %951 = vmatprep.subr.mxu0 0.0
    %952 = vmatpush1.msra.mxu0 0.0
    %953 = vmatprep.subr.mxu0 0.0
    %954 = vmatpush1.msra.mxu0 0.0
    %955 = vmatprep.subr.mxu0 0.0
    %956 = vmatpush1.msra.mxu0 0.0
    %957 = vmatprep.subr.mxu0 0.0
    %958 = vmatpush1.msra.mxu0 0.0
    %959 = vmatprep.subr.mxu0 0.0
    %960 = vmatpush1.msra.mxu0 0.0
    %961 = vmatprep.subr.mxu0 0.0
    %962 = vmatpush1.msra.mxu0 0.0
    %963 = vmatprep.subr.mxu0 0.0
    %964 = vmatpush1.msra.mxu0 0.0
    %965 = vmatprep.subr.mxu0 0.0
    %966 = vmatpush1.msra.mxu0 0.0
    %967 = vmatprep.subr.mxu0 0.0
    %968 = vmatpush1.msra.mxu0 0.0
    %969 = vmatprep.subr.mxu0 0.0
    %970 = vmatpush1.msra.mxu0 0.0
    %971 = vmatprep.subr.mxu0 0.0
    %972 = vmatpush1.msra.mxu0 0.0
    %973 = vmatprep.subr.mxu0 0.0
    %974 = vmatpush1.msra.mxu0 0.0
    %975 = vmatprep.subr.mxu0 0.0
    %976 = vmatpush1.msra.mxu0 0.0
    %977 = vmatprep.mubr.f32.mxu0 0.0
    %978 = vmatmul.mubr.f32.gmra.mrb[0].mxu0 %v911
    %v979 = vpop.f32.mrb[0].mxu0
    %v980 = vadd.f32 0.0, %v979
    %v981 = vpop.f32.mrb[0].mxu0
    %v982 = vadd.f32 0.0, %v981
    %983 = vdwg.mxu0
    %984 = vmatprep.subr.mxu0 0.0
    %985 = vmatpush1.msra.mxu0 %v544
    %986 = vmatprep.subr.mxu0 0.0
    %987 = vmatpush1.msra.mxu0 %v545
    %988 = vmatprep.subr.mxu0 0.0
    %989 = vmatpush1.msra.mxu0 %v546
    %990 = vmatprep.subr.mxu0 0.0
    %991 = vmatpush1.msra.mxu0 %v547
    %992 = vmatprep.subr.mxu0 0.0
    %993 = vmatpush1.msra.mxu0 %v548
    %994 = vmatprep.subr.mxu0 0.0
    %995 = vmatpush1.msra.mxu0 %v549
    %996 = vmatprep.subr.mxu0 0.0
    %997 = vmatpush1.msra.mxu0 %v550
    %998 = vmatprep.subr.mxu0 0.0
    %999 = vmatpush1.msra.mxu0 %v551
    %1000 = vmatprep.subr.mxu0 0.0
    %1001 = vmatpush1.msra.mxu0 %v552
    %1002 = vmatprep.subr.mxu0 0.0
    %1003 = vmatpush1.msra.mxu0 %v553
    %1004 = vmatprep.subr.mxu0 0.0
    %1005 = vmatpush1.msra.mxu0 %v554
    %1006 = vmatprep.subr.mxu0 0.0
    %1007 = vmatpush1.msra.mxu0 %v555
    %1008 = vmatprep.subr.mxu0 0.0
    %1009 = vmatpush1.msra.mxu0 %v556
    %1010 = vmatprep.subr.mxu0 0.0
    %1011 = vmatpush1.msra.mxu0 %v557
    %1012 = vmatprep.subr.mxu0 0.0
    %1013 = vmatpush1.msra.mxu0 %v558
    %1014 = vmatprep.subr.mxu0 0.0
    %1015 = vmatpush1.msra.mxu0 %v559
    %1016 = vmatprep.subr.mxu0 0.0
    %1017 = vmatpush1.msra.mxu0 0.0
    %1018 = vmatprep.subr.mxu0 0.0
    %1019 = vmatpush1.msra.mxu0 0.0
    %1020 = vmatprep.subr.mxu0 0.0
    %1021 = vmatpush1.msra.mxu0 0.0
    %1022 = vmatprep.subr.mxu0 0.0
    %1023 = vmatpush1.msra.mxu0 0.0
    %1024 = vmatprep.subr.mxu0 0.0
    %1025 = vmatpush1.msra.mxu0 0.0
    %1026 = vmatprep.subr.mxu0 0.0
    %1027 = vmatpush1.msra.mxu0 0.0
    %1028 = vmatprep.subr.mxu0 0.0
    %1029 = vmatpush1.msra.mxu0 0.0
    %1030 = vmatprep.subr.mxu0 0.0
    %1031 = vmatpush1.msra.mxu0 0.0
    %1032 = vmatprep.subr.mxu0 0.0
    %1033 = vmatpush1.msra.mxu0 0.0
    %1034 = vmatprep.subr.mxu0 0.0
    %1035 = vmatpush1.msra.mxu0 0.0
    %1036 = vmatprep.subr.mxu0 0.0
    %1037 = vmatpush1.msra.mxu0 0.0
    %1038 = vmatprep.subr.mxu0 0.0
    %1039 = vmatpush1.msra.mxu0 0.0
    %1040 = vmatprep.subr.mxu0 0.0
    %1041 = vmatpush1.msra.mxu0 0.0
    %1042 = vmatprep.subr.mxu0 0.0
    %1043 = vmatpush1.msra.mxu0 0.0
    %1044 = vmatprep.subr.mxu0 0.0
    %1045 = vmatpush1.msra.mxu0 0.0
    %1046 = vmatprep.subr.mxu0 0.0
    %1047 = vmatpush1.msra.mxu0 0.0
    %1048 = vmatprep.mubr.f32.mxu0 0.0
    %1049 = vmatmul.mubr.f32.gmra.mrb[0].mxu0 %v911
    %v1050 = vpop.f32.mrb[0].mxu0
    %v1051 = vadd.f32 %v213, %v1050
    %v1052 = vpop.f32.mrb[0].mxu0
    %1053 = vdwg.mxu0
    %v1055 = vrot.slane %v980, 5
    %v1057 = vadd.f32 %v139, %v1055
    %v1058 = vxor.u32 %v1057, 2147483648
    %v1059 = vmul.f32 %v1058, 1.442695
    %v1060 = vpow.pop %v1059
    %v1061 = vadd.f32 %v1060, 1.0
    %v1062 = vrcp.pop %v1061
    %v1063 = vmul.f32 1.0, %v1062
    %v1065 = vrot.slane %v982, 5
    %v1067 = vadd.f32 %v141, %v1065
    %v1068 = vxor.u32 %v1067, 2147483648
    %v1069 = vmul.f32 %v1068, 1.442695
    %v1070 = vpow.pop %v1069
    %v1071 = vadd.f32 %v1070, 1.0
    %v1072 = vrcp.pop %v1071
    %v1073 = vmul.f32 1.0, %v1072
    %v1075 = vrot.slane %v1051, 5
    %v1077 = vmul.f32 %v1063, %v1075
    %v1078 = vadd.f32 %v210, %v1077
    %v1079 = vtanh.pop %v1078
    %v1080 = vsub.f32 1.0, %v1073
    %v1081 = vmul.f32 %v1080, %v1079
    %v1082 = vrot.slane %v909, 7
    %v1084 = vmul.f32 %v1073, %v1082
    %v1085 = vadd.f32 %v1081, %v1084
    %v1087 = vrot.slane %v1085, 3
    %1089 = vmatprep.subr.mxu0 %v513
    %1090 = vmatpush1.msra.mxu0 %v512
    %1091 = vmatprep.subr.mxu0 %v515
    %1092 = vmatpush1.msra.mxu0 %v514
    %1093 = vmatprep.subr.mxu0 %v517
    %1094 = vmatpush1.msra.mxu0 %v516
    %1095 = vmatprep.subr.mxu0 %v519
    %1096 = vmatpush1.msra.mxu0 %v518
    %1097 = vmatprep.subr.mxu0 %v521
    %1098 = vmatpush1.msra.mxu0 %v520
    %1099 = vmatprep.subr.mxu0 %v523
    %1100 = vmatpush1.msra.mxu0 %v522
    %1101 = vmatprep.subr.mxu0 %v525
    %1102 = vmatpush1.msra.mxu0 %v524
    %1103 = vmatprep.subr.mxu0 %v527
    %1104 = vmatpush1.msra.mxu0 %v526
    %1105 = vmatprep.subr.mxu0 %v529
    %1106 = vmatpush1.msra.mxu0 %v528
    %1107 = vmatprep.subr.mxu0 %v531
    %1108 = vmatpush1.msra.mxu0 %v530
    %1109 = vmatprep.subr.mxu0 %v533
    %1110 = vmatpush1.msra.mxu0 %v532
    %1111 = vmatprep.subr.mxu0 %v535
    %1112 = vmatpush1.msra.mxu0 %v534
    %1113 = vmatprep.subr.mxu0 %v537
    %1114 = vmatpush1.msra.mxu0 %v536
    %1115 = vmatprep.subr.mxu0 %v539
    %1116 = vmatpush1.msra.mxu0 %v538
    %1117 = vmatprep.subr.mxu0 %v541
    %1118 = vmatpush1.msra.mxu0 %v540
    %1119 = vmatprep.subr.mxu0 %v543
    %1120 = vmatpush1.msra.mxu0 %v542
    %1121 = vmatprep.subr.mxu0 0.0
    %1122 = vmatpush1.msra.mxu0 0.0
    %1123 = vmatprep.subr.mxu0 0.0
    %1124 = vmatpush1.msra.mxu0 0.0
    %1125 = vmatprep.subr.mxu0 0.0
    %1126 = vmatpush1.msra.mxu0 0.0
    %1127 = vmatprep.subr.mxu0 0.0
    %1128 = vmatpush1.msra.mxu0 0.0
    %1129 = vmatprep.subr.mxu0 0.0
    %1130 = vmatpush1.msra.mxu0 0.0
    %1131 = vmatprep.subr.mxu0 0.0
    %1132 = vmatpush1.msra.mxu0 0.0
    %1133 = vmatprep.subr.mxu0 0.0
    %1134 = vmatpush1.msra.mxu0 0.0
    %1135 = vmatprep.subr.mxu0 0.0
    %1136 = vmatpush1.msra.mxu0 0.0
    %1137 = vmatprep.subr.mxu0 0.0
    %1138 = vmatpush1.msra.mxu0 0.0
    %1139 = vmatprep.subr.mxu0 0.0
    %1140 = vmatpush1.msra.mxu0 0.0
    %1141 = vmatprep.subr.mxu0 0.0
    %1142 = vmatpush1.msra.mxu0 0.0
    %1143 = vmatprep.subr.mxu0 0.0
    %1144 = vmatpush1.msra.mxu0 0.0
    %1145 = vmatprep.subr.mxu0 0.0
    %1146 = vmatpush1.msra.mxu0 0.0
    %1147 = vmatprep.subr.mxu0 0.0
    %1148 = vmatpush1.msra.mxu0 0.0
    %1149 = vmatprep.subr.mxu0 0.0
    %1150 = vmatpush1.msra.mxu0 0.0
    %1151 = vmatprep.subr.mxu0 0.0
    %1152 = vmatpush1.msra.mxu0 0.0
    %1153 = vmatprep.mubr.f32.mxu0 0.0
    %1154 = vmatmul.mubr.f32.gmra.mrb[0].mxu0 %v1087
    %v1155 = vpop.f32.mrb[0].mxu0
    %v1156 = vadd.f32 0.0, %v1155
    %v1157 = vpop.f32.mrb[0].mxu0
    %v1158 = vadd.f32 0.0, %v1157
    %1159 = vdwg.mxu0
    %1160 = vmatprep.subr.mxu0 0.0
    %1161 = vmatpush1.msra.mxu0 %v544
    %1162 = vmatprep.subr.mxu0 0.0
    %1163 = vmatpush1.msra.mxu0 %v545
    %1164 = vmatprep.subr.mxu0 0.0
    %1165 = vmatpush1.msra.mxu0 %v546
    %1166 = vmatprep.subr.mxu0 0.0
    %1167 = vmatpush1.msra.mxu0 %v547
    %1168 = vmatprep.subr.mxu0 0.0
    %1169 = vmatpush1.msra.mxu0 %v548
    %1170 = vmatprep.subr.mxu0 0.0
    %1171 = vmatpush1.msra.mxu0 %v549
    %1172 = vmatprep.subr.mxu0 0.0
    %1173 = vmatpush1.msra.mxu0 %v550
    %1174 = vmatprep.subr.mxu0 0.0
    %1175 = vmatpush1.msra.mxu0 %v551
    %1176 = vmatprep.subr.mxu0 0.0
    %1177 = vmatpush1.msra.mxu0 %v552
    %1178 = vmatprep.subr.mxu0 0.0
    %1179 = vmatpush1.msra.mxu0 %v553
    %1180 = vmatprep.subr.mxu0 0.0
    %1181 = vmatpush1.msra.mxu0 %v554
    %1182 = vmatprep.subr.mxu0 0.0
    %1183 = vmatpush1.msra.mxu0 %v555
    %1184 = vmatprep.subr.mxu0 0.0
    %1185 = vmatpush1.msra.mxu0 %v556
    %1186 = vmatprep.subr.mxu0 0.0
    %1187 = vmatpush1.msra.mxu0 %v557
    %1188 = vmatprep.subr.mxu0 0.0
    %1189 = vmatpush1.msra.mxu0 %v558
    %1190 = vmatprep.subr.mxu0 0.0
    %1191 = vmatpush1.msra.mxu0 %v559
    %1192 = vmatprep.subr.mxu0 0.0
    %1193 = vmatpush1.msra.mxu0 0.0
    %1194 = vmatprep.subr.mxu0 0.0
    %1195 = vmatpush1.msra.mxu0 0.0
    %1196 = vmatprep.subr.mxu0 0.0
    %1197 = vmatpush1.msra.mxu0 0.0
    %1198 = vmatprep.subr.mxu0 0.0
    %1199 = vmatpush1.msra.mxu0 0.0
    %1200 = vmatprep.subr.mxu0 0.0
    %1201 = vmatpush1.msra.mxu0 0.0
    %1202 = vmatprep.subr.mxu0 0.0
    %1203 = vmatpush1.msra.mxu0 0.0
    %1204 = vmatprep.subr.mxu0 0.0
    %1205 = vmatpush1.msra.mxu0 0.0
    %1206 = vmatprep.subr.mxu0 0.0
    %1207 = vmatpush1.msra.mxu0 0.0
    %1208 = vmatprep.subr.mxu0 0.0
    %1209 = vmatpush1.msra.mxu0 0.0
    %1210 = vmatprep.subr.mxu0 0.0
    %1211 = vmatpush1.msra.mxu0 0.0
    %1212 = vmatprep.subr.mxu0 0.0
    %1213 = vmatpush1.msra.mxu0 0.0
    %1214 = vmatprep.subr.mxu0 0.0
    %1215 = vmatpush1.msra.mxu0 0.0
    %1216 = vmatprep.subr.mxu0 0.0
    %1217 = vmatpush1.msra.mxu0 0.0
    %1218 = vmatprep.subr.mxu0 0.0
    %1219 = vmatpush1.msra.mxu0 0.0
    %1220 = vmatprep.subr.mxu0 0.0
    %1221 = vmatpush1.msra.mxu0 0.0
    %1222 = vmatprep.subr.mxu0 0.0
    %1223 = vmatpush1.msra.mxu0 0.0
    %1224 = vmatprep.mubr.f32.mxu0 0.0
    %1225 = vmatmul.mubr.f32.gmra.mrb[0].mxu0 %v1087
    %v1226 = vpop.f32.mrb[0].mxu0
    %v1227 = vadd.f32 %v213, %v1226
    %v1228 = vpop.f32.mrb[0].mxu0
    %1229 = vdwg.mxu0
    %v1231 = vrot.slane %v1156, 4
    %v1233 = vadd.f32 %v139, %v1231
    %v1234 = vxor.u32 %v1233, 2147483648
    %v1235 = vmul.f32 %v1234, 1.442695
    %v1236 = vpow.pop %v1235
    %v1237 = vadd.f32 %v1236, 1.0
    %v1238 = vrcp.pop %v1237
    %v1239 = vmul.f32 1.0, %v1238
    %v1241 = vrot.slane %v1158, 4
    %v1243 = vadd.f32 %v141, %v1241
    %v1244 = vxor.u32 %v1243, 2147483648
    %v1245 = vmul.f32 %v1244, 1.442695
    %v1246 = vpow.pop %v1245
    %v1247 = vadd.f32 %v1246, 1.0
    %v1248 = vrcp.pop %v1247
    %v1249 = vmul.f32 1.0, %v1248
    %v1251 = vrot.slane %v1227, 4
    %v1253 = vmul.f32 %v1239, %v1251
    %v1254 = vadd.f32 %v210, %v1253
    %v1255 = vtanh.pop %v1254
    %v1256 = vsub.f32 1.0, %v1249
    %v1257 = vmul.f32 %v1256, %v1255
    %v1258 = vrot.slane %v1085, 7
    %v1260 = vmul.f32 %v1249, %v1258
    %v1261 = vadd.f32 %v1257, %v1260
    %v1263 = vrot.slane %v1261, 4
    %1265 = vmatprep.subr.mxu0 %v513
    %1266 = vmatpush1.msra.mxu0 %v512
    %1267 = vmatprep.subr.mxu0 %v515
    %1268 = vmatpush1.msra.mxu0 %v514
    %1269 = vmatprep.subr.mxu0 %v517
    %1270 = vmatpush1.msra.mxu0 %v516
    %1271 = vmatprep.subr.mxu0 %v519
    %1272 = vmatpush1.msra.mxu0 %v518
    %1273 = vmatprep.subr.mxu0 %v521
    %1274 = vmatpush1.msra.mxu0 %v520
    %1275 = vmatprep.subr.mxu0 %v523
    %1276 = vmatpush1.msra.mxu0 %v522
    %1277 = vmatprep.subr.mxu0 %v525
    %1278 = vmatpush1.msra.mxu0 %v524
    %1279 = vmatprep.subr.mxu0 %v527
    %1280 = vmatpush1.msra.mxu0 %v526
    %1281 = vmatprep.subr.mxu0 %v529
    %1282 = vmatpush1.msra.mxu0 %v528
    %1283 = vmatprep.subr.mxu0 %v531
    %1284 = vmatpush1.msra.mxu0 %v530
    %1285 = vmatprep.subr.mxu0 %v533
    %1286 = vmatpush1.msra.mxu0 %v532
    %1287 = vmatprep.subr.mxu0 %v535
    %1288 = vmatpush1.msra.mxu0 %v534
    %1289 = vmatprep.subr.mxu0 %v537
    %1290 = vmatpush1.msra.mxu0 %v536
    %1291 = vmatprep.subr.mxu0 %v539
    %1292 = vmatpush1.msra.mxu0 %v538
    %1293 = vmatprep.subr.mxu0 %v541
    %1294 = vmatpush1.msra.mxu0 %v540
    %1295 = vmatprep.subr.mxu0 %v543
    %1296 = vmatpush1.msra.mxu0 %v542
    %1297 = vmatprep.subr.mxu0 0.0
    %1298 = vmatpush1.msra.mxu0 0.0
    %1299 = vmatprep.subr.mxu0 0.0
    %1300 = vmatpush1.msra.mxu0 0.0
    %1301 = vmatprep.subr.mxu0 0.0
    %1302 = vmatpush1.msra.mxu0 0.0
    %1303 = vmatprep.subr.mxu0 0.0
    %1304 = vmatpush1.msra.mxu0 0.0
    %1305 = vmatprep.subr.mxu0 0.0
    %1306 = vmatpush1.msra.mxu0 0.0
    %1307 = vmatprep.subr.mxu0 0.0
    %1308 = vmatpush1.msra.mxu0 0.0
    %1309 = vmatprep.subr.mxu0 0.0
    %1310 = vmatpush1.msra.mxu0 0.0
    %1311 = vmatprep.subr.mxu0 0.0
    %1312 = vmatpush1.msra.mxu0 0.0
    %1313 = vmatprep.subr.mxu0 0.0
    %1314 = vmatpush1.msra.mxu0 0.0
    %1315 = vmatprep.subr.mxu0 0.0
    %1316 = vmatpush1.msra.mxu0 0.0
    %1317 = vmatprep.subr.mxu0 0.0
    %1318 = vmatpush1.msra.mxu0 0.0
    %1319 = vmatprep.subr.mxu0 0.0
    %1320 = vmatpush1.msra.mxu0 0.0
    %1321 = vmatprep.subr.mxu0 0.0
    %1322 = vmatpush1.msra.mxu0 0.0
    %1323 = vmatprep.subr.mxu0 0.0
    %1324 = vmatpush1.msra.mxu0 0.0
    %1325 = vmatprep.subr.mxu0 0.0
    %1326 = vmatpush1.msra.mxu0 0.0
    %1327 = vmatprep.subr.mxu0 0.0
    %1328 = vmatpush1.msra.mxu0 0.0
    %1329 = vmatprep.mubr.f32.mxu0 0.0
    %1330 = vmatmul.mubr.f32.gmra.mrb[0].mxu0 %v1263
    %v1331 = vpop.f32.mrb[0].mxu0
    %v1332 = vadd.f32 0.0, %v1331
    %v1333 = vpop.f32.mrb[0].mxu0
    %v1334 = vadd.f32 0.0, %v1333
    %1335 = vdwg.mxu0
    %1336 = vmatprep.subr.mxu0 0.0
    %1337 = vmatpush1.msra.mxu0 %v544
    %1338 = vmatprep.subr.mxu0 0.0
    %1339 = vmatpush1.msra.mxu0 %v545
    %1340 = vmatprep.subr.mxu0 0.0
    %1341 = vmatpush1.msra.mxu0 %v546
    %1342 = vmatprep.subr.mxu0 0.0
    %1343 = vmatpush1.msra.mxu0 %v547
    %1344 = vmatprep.subr.mxu0 0.0
    %1345 = vmatpush1.msra.mxu0 %v548
    %1346 = vmatprep.subr.mxu0 0.0
    %1347 = vmatpush1.msra.mxu0 %v549
    %1348 = vmatprep.subr.mxu0 0.0
    %1349 = vmatpush1.msra.mxu0 %v550
    %1350 = vmatprep.subr.mxu0 0.0
    %1351 = vmatpush1.msra.mxu0 %v551
    %1352 = vmatprep.subr.mxu0 0.0
    %1353 = vmatpush1.msra.mxu0 %v552
    %1354 = vmatprep.subr.mxu0 0.0
    %1355 = vmatpush1.msra.mxu0 %v553
    %1356 = vmatprep.subr.mxu0 0.0
    %1357 = vmatpush1.msra.mxu0 %v554
    %1358 = vmatprep.subr.mxu0 0.0
    %1359 = vmatpush1.msra.mxu0 %v555
    %1360 = vmatprep.subr.mxu0 0.0
    %1361 = vmatpush1.msra.mxu0 %v556
    %1362 = vmatprep.subr.mxu0 0.0
    %1363 = vmatpush1.msra.mxu0 %v557
    %1364 = vmatprep.subr.mxu0 0.0
    %1365 = vmatpush1.msra.mxu0 %v558
    %1366 = vmatprep.subr.mxu0 0.0
    %1367 = vmatpush1.msra.mxu0 %v559
    %1368 = vmatprep.subr.mxu0 0.0
    %1369 = vmatpush1.msra.mxu0 0.0
    %1370 = vmatprep.subr.mxu0 0.0
    %1371 = vmatpush1.msra.mxu0 0.0
    %1372 = vmatprep.subr.mxu0 0.0
    %1373 = vmatpush1.msra.mxu0 0.0
    %1374 = vmatprep.subr.mxu0 0.0
    %1375 = vmatpush1.msra.mxu0 0.0
    %1376 = vmatprep.subr.mxu0 0.0
    %1377 = vmatpush1.msra.mxu0 0.0
    %1378 = vmatprep.subr.mxu0 0.0
    %1379 = vmatpush1.msra.mxu0 0.0
    %1380 = vmatprep.subr.mxu0 0.0
    %1381 = vmatpush1.msra.mxu0 0.0
    %1382 = vmatprep.subr.mxu0 0.0
    %1383 = vmatpush1.msra.mxu0 0.0
    %1384 = vmatprep.subr.mxu0 0.0
    %1385 = vmatpush1.msra.mxu0 0.0
    %1386 = vmatprep.subr.mxu0 0.0
    %1387 = vmatpush1.msra.mxu0 0.0
    %1388 = vmatprep.subr.mxu0 0.0
    %1389 = vmatpush1.msra.mxu0 0.0
    %1390 = vmatprep.subr.mxu0 0.0
    %1391 = vmatpush1.msra.mxu0 0.0
    %1392 = vmatprep.subr.mxu0 0.0
    %1393 = vmatpush1.msra.mxu0 0.0
    %1394 = vmatprep.subr.mxu0 0.0
    %1395 = vmatpush1.msra.mxu0 0.0
    %1396 = vmatprep.subr.mxu0 0.0
    %1397 = vmatpush1.msra.mxu0 0.0
    %1398 = vmatprep.subr.mxu0 0.0
    %1399 = vmatpush1.msra.mxu0 0.0
    %1400 = vmatprep.mubr.f32.mxu0 0.0
    %1401 = vmatmul.mubr.f32.gmra.mrb[0].mxu0 %v1263
    %v1402 = vpop.f32.mrb[0].mxu0
    %v1403 = vadd.f32 %v213, %v1402
    %v1404 = vpop.f32.mrb[0].mxu0
    %1405 = vdwg.mxu0
    %v1407 = vrot.slane %v1332, 3
    %v1409 = vadd.f32 %v139, %v1407
    %v1410 = vxor.u32 %v1409, 2147483648
    %v1411 = vmul.f32 %v1410, 1.442695
    %v1412 = vpow.pop %v1411
    %v1413 = vadd.f32 %v1412, 1.0
    %v1414 = vrcp.pop %v1413
    %v1415 = vmul.f32 1.0, %v1414
    %v1417 = vrot.slane %v1334, 3
    %v1419 = vadd.f32 %v141, %v1417
    %v1420 = vxor.u32 %v1419, 2147483648
    %v1421 = vmul.f32 %v1420, 1.442695
    %v1422 = vpow.pop %v1421
    %v1423 = vadd.f32 %v1422, 1.0
    %v1424 = vrcp.pop %v1423
    %v1425 = vmul.f32 1.0, %v1424
    %v1427 = vrot.slane %v1403, 3
    %v1429 = vmul.f32 %v1415, %v1427
    %v1430 = vadd.f32 %v210, %v1429
    %v1431 = vtanh.pop %v1430
    %v1432 = vsub.f32 1.0, %v1425
    %v1433 = vmul.f32 %v1432, %v1431
    %v1434 = vrot.slane %v1261, 7
    %v1436 = vmul.f32 %v1425, %v1434
    %v1437 = vadd.f32 %v1433, %v1436
    %v1439 = vrot.slane %v1437, 5
    %1441 = vmatprep.subr.mxu0 %v513
    %1442 = vmatpush1.msra.mxu0 %v512
    %1443 = vmatprep.subr.mxu0 %v515
    %1444 = vmatpush1.msra.mxu0 %v514
    %1445 = vmatprep.subr.mxu0 %v517
    %1446 = vmatpush1.msra.mxu0 %v516
    %1447 = vmatprep.subr.mxu0 %v519
    %1448 = vmatpush1.msra.mxu0 %v518
    %1449 = vmatprep.subr.mxu0 %v521
    %1450 = vmatpush1.msra.mxu0 %v520
    %1451 = vmatprep.subr.mxu0 %v523
    %1452 = vmatpush1.msra.mxu0 %v522
    %1453 = vmatprep.subr.mxu0 %v525
    %1454 = vmatpush1.msra.mxu0 %v524
    %1455 = vmatprep.subr.mxu0 %v527
    %1456 = vmatpush1.msra.mxu0 %v526
    %1457 = vmatprep.subr.mxu0 %v529
    %1458 = vmatpush1.msra.mxu0 %v528
    %1459 = vmatprep.subr.mxu0 %v531
    %1460 = vmatpush1.msra.mxu0 %v530
    %1461 = vmatprep.subr.mxu0 %v533
    %1462 = vmatpush1.msra.mxu0 %v532
    %1463 = vmatprep.subr.mxu0 %v535
    %1464 = vmatpush1.msra.mxu0 %v534
    %1465 = vmatprep.subr.mxu0 %v537
    %1466 = vmatpush1.msra.mxu0 %v536
    %1467 = vmatprep.subr.mxu0 %v539
    %1468 = vmatpush1.msra.mxu0 %v538
    %1469 = vmatprep.subr.mxu0 %v541
    %1470 = vmatpush1.msra.mxu0 %v540
    %1471 = vmatprep.subr.mxu0 %v543
    %1472 = vmatpush1.msra.mxu0 %v542
    %1473 = vmatprep.subr.mxu0 0.0
    %1474 = vmatpush1.msra.mxu0 0.0
    %1475 = vmatprep.subr.mxu0 0.0
    %1476 = vmatpush1.msra.mxu0 0.0
    %1477 = vmatprep.subr.mxu0 0.0
    %1478 = vmatpush1.msra.mxu0 0.0
    %1479 = vmatprep.subr.mxu0 0.0
    %1480 = vmatpush1.msra.mxu0 0.0
    %1481 = vmatprep.subr.mxu0 0.0
    %1482 = vmatpush1.msra.mxu0 0.0
    %1483 = vmatprep.subr.mxu0 0.0
    %1484 = vmatpush1.msra.mxu0 0.0
    %1485 = vmatprep.subr.mxu0 0.0
    %1486 = vmatpush1.msra.mxu0 0.0
    %1487 = vmatprep.subr.mxu0 0.0
    %1488 = vmatpush1.msra.mxu0 0.0
    %1489 = vmatprep.subr.mxu0 0.0
    %1490 = vmatpush1.msra.mxu0 0.0
    %1491 = vmatprep.subr.mxu0 0.0
    %1492 = vmatpush1.msra.mxu0 0.0
    %1493 = vmatprep.subr.mxu0 0.0
    %1494 = vmatpush1.msra.mxu0 0.0
    %1495 = vmatprep.subr.mxu0 0.0
    %1496 = vmatpush1.msra.mxu0 0.0
    %1497 = vmatprep.subr.mxu0 0.0
    %1498 = vmatpush1.msra.mxu0 0.0
    %1499 = vmatprep.subr.mxu0 0.0
    %1500 = vmatpush1.msra.mxu0 0.0
    %1501 = vmatprep.subr.mxu0 0.0
    %1502 = vmatpush1.msra.mxu0 0.0
    %1503 = vmatprep.subr.mxu0 0.0
    %1504 = vmatpush1.msra.mxu0 0.0
    %1505 = vmatprep.mubr.f32.mxu0 0.0
    %1506 = vmatmul.mubr.f32.gmra.mrb[0].mxu0 %v1439
    %v1507 = vpop.f32.mrb[0].mxu0
    %v1508 = vadd.f32 0.0, %v1507
    %v1509 = vpop.f32.mrb[0].mxu0
    %v1510 = vadd.f32 0.0, %v1509
    %1511 = vdwg.mxu0
    %1512 = vmatprep.subr.mxu0 0.0
    %1513 = vmatpush1.msra.mxu0 %v544
    %1514 = vmatprep.subr.mxu0 0.0
    %1515 = vmatpush1.msra.mxu0 %v545
    %1516 = vmatprep.subr.mxu0 0.0
    %1517 = vmatpush1.msra.mxu0 %v546
    %1518 = vmatprep.subr.mxu0 0.0
    %1519 = vmatpush1.msra.mxu0 %v547
    %1520 = vmatprep.subr.mxu0 0.0
    %1521 = vmatpush1.msra.mxu0 %v548
    %1522 = vmatprep.subr.mxu0 0.0
    %1523 = vmatpush1.msra.mxu0 %v549
    %1524 = vmatprep.subr.mxu0 0.0
    %1525 = vmatpush1.msra.mxu0 %v550
    %1526 = vmatprep.subr.mxu0 0.0
    %1527 = vmatpush1.msra.mxu0 %v551
    %1528 = vmatprep.subr.mxu0 0.0
    %1529 = vmatpush1.msra.mxu0 %v552
    %1530 = vmatprep.subr.mxu0 0.0
    %1531 = vmatpush1.msra.mxu0 %v553
    %1532 = vmatprep.subr.mxu0 0.0
    %1533 = vmatpush1.msra.mxu0 %v554
    %1534 = vmatprep.subr.mxu0 0.0
    %1535 = vmatpush1.msra.mxu0 %v555
    %1536 = vmatprep.subr.mxu0 0.0
    %1537 = vmatpush1.msra.mxu0 %v556
    %1538 = vmatprep.subr.mxu0 0.0
    %1539 = vmatpush1.msra.mxu0 %v557
    %1540 = vmatprep.subr.mxu0 0.0
    %1541 = vmatpush1.msra.mxu0 %v558
    %1542 = vmatprep.subr.mxu0 0.0
    %1543 = vmatpush1.msra.mxu0 %v559
    %1544 = vmatprep.subr.mxu0 0.0
    %1545 = vmatpush1.msra.mxu0 0.0
    %1546 = vmatprep.subr.mxu0 0.0
    %1547 = vmatpush1.msra.mxu0 0.0
    %1548 = vmatprep.subr.mxu0 0.0
    %1549 = vmatpush1.msra.mxu0 0.0
    %1550 = vmatprep.subr.mxu0 0.0
    %1551 = vmatpush1.msra.mxu0 0.0
    %1552 = vmatprep.subr.mxu0 0.0
    %1553 = vmatpush1.msra.mxu0 0.0
    %1554 = vmatprep.subr.mxu0 0.0
    %1555 = vmatpush1.msra.mxu0 0.0
    %1556 = vmatprep.subr.mxu0 0.0
    %1557 = vmatpush1.msra.mxu0 0.0
    %1558 = vmatprep.subr.mxu0 0.0
    %1559 = vmatpush1.msra.mxu0 0.0
    %1560 = vmatprep.subr.mxu0 0.0
    %1561 = vmatpush1.msra.mxu0 0.0
    %1562 = vmatprep.subr.mxu0 0.0
    %1563 = vmatpush1.msra.mxu0 0.0
    %1564 = vmatprep.subr.mxu0 0.0
    %1565 = vmatpush1.msra.mxu0 0.0
    %1566 = vmatprep.subr.mxu0 0.0
    %1567 = vmatpush1.msra.mxu0 0.0
    %1568 = vmatprep.subr.mxu0 0.0
    %1569 = vmatpush1.msra.mxu0 0.0
    %1570 = vmatprep.subr.mxu0 0.0
    %1571 = vmatpush1.msra.mxu0 0.0
    %1572 = vmatprep.subr.mxu0 0.0
    %1573 = vmatpush1.msra.mxu0 0.0
    %1574 = vmatprep.subr.mxu0 0.0
    %1575 = vmatpush1.msra.mxu0 0.0
    %1576 = vmatprep.mubr.f32.mxu0 0.0
    %1577 = vmatmul.mubr.f32.gmra.mrb[0].mxu0 %v1439
    %v1578 = vpop.f32.mrb[0].mxu0
    %v1579 = vadd.f32 %v213, %v1578
    %v1580 = vpop.f32.mrb[0].mxu0
    %1581 = vdwg.mxu0
    %v1583 = vrot.slane %v1508, 2
    %v1585 = vadd.f32 %v139, %v1583
    %v1586 = vxor.u32 %v1585, 2147483648
    %v1587 = vmul.f32 %v1586, 1.442695
    %v1588 = vpow.pop %v1587
    %v1589 = vadd.f32 %v1588, 1.0
    %v1590 = vrcp.pop %v1589
    %v1591 = vmul.f32 1.0, %v1590
    %v1593 = vrot.slane %v1510, 2
    %v1595 = vadd.f32 %v141, %v1593
    %v1596 = vxor.u32 %v1595, 2147483648
    %v1597 = vmul.f32 %v1596, 1.442695
    %v1598 = vpow.pop %v1597
    %v1599 = vadd.f32 %v1598, 1.0
    %v1600 = vrcp.pop %v1599
    %v1601 = vmul.f32 1.0, %v1600
    %v1603 = vrot.slane %v1579, 2
    %v1605 = vmul.f32 %v1591, %v1603
    %v1606 = vadd.f32 %v210, %v1605
    %v1607 = vtanh.pop %v1606
    %v1608 = vsub.f32 1.0, %v1601
    %v1609 = vmul.f32 %v1608, %v1607
    %v1610 = vrot.slane %v1437, 7
    %v1612 = vmul.f32 %v1601, %v1610
    %v1613 = vadd.f32 %v1609, %v1612
    %v1615 = vrot.slane %v1613, 6
    %1617 = vmatprep.subr.mxu0 %v513
    %1618 = vmatpush1.msra.mxu0 %v512
    %1619 = vmatprep.subr.mxu0 %v515
    %1620 = vmatpush1.msra.mxu0 %v514
    %1621 = vmatprep.subr.mxu0 %v517
    %1622 = vmatpush1.msra.mxu0 %v516
    %1623 = vmatprep.subr.mxu0 %v519
    %1624 = vmatpush1.msra.mxu0 %v518
    %1625 = vmatprep.subr.mxu0 %v521
    %1626 = vmatpush1.msra.mxu0 %v520
    %1627 = vmatprep.subr.mxu0 %v523
    %1628 = vmatpush1.msra.mxu0 %v522
    %1629 = vmatprep.subr.mxu0 %v525
    %1630 = vmatpush1.msra.mxu0 %v524
    %1631 = vmatprep.subr.mxu0 %v527
    %1632 = vmatpush1.msra.mxu0 %v526
    %1633 = vmatprep.subr.mxu0 %v529
    %1634 = vmatpush1.msra.mxu0 %v528
    %1635 = vmatprep.subr.mxu0 %v531
    %1636 = vmatpush1.msra.mxu0 %v530
    %1637 = vmatprep.subr.mxu0 %v533
    %1638 = vmatpush1.msra.mxu0 %v532
    %1639 = vmatprep.subr.mxu0 %v535
    %1640 = vmatpush1.msra.mxu0 %v534
    %1641 = vmatprep.subr.mxu0 %v537
    %1642 = vmatpush1.msra.mxu0 %v536
    %1643 = vmatprep.subr.mxu0 %v539
    %1644 = vmatpush1.msra.mxu0 %v538
    %1645 = vmatprep.subr.mxu0 %v541
    %1646 = vmatpush1.msra.mxu0 %v540
    %1647 = vmatprep.subr.mxu0 %v543
    %1648 = vmatpush1.msra.mxu0 %v542
    %1649 = vmatprep.subr.mxu0 0.0
    %1650 = vmatpush1.msra.mxu0 0.0
    %1651 = vmatprep.subr.mxu0 0.0
    %1652 = vmatpush1.msra.mxu0 0.0
    %1653 = vmatprep.subr.mxu0 0.0
    %1654 = vmatpush1.msra.mxu0 0.0
    %1655 = vmatprep.subr.mxu0 0.0
    %1656 = vmatpush1.msra.mxu0 0.0
    %1657 = vmatprep.subr.mxu0 0.0
    %1658 = vmatpush1.msra.mxu0 0.0
    %1659 = vmatprep.subr.mxu0 0.0
    %1660 = vmatpush1.msra.mxu0 0.0
    %1661 = vmatprep.subr.mxu0 0.0
    %1662 = vmatpush1.msra.mxu0 0.0
    %1663 = vmatprep.subr.mxu0 0.0
    %1664 = vmatpush1.msra.mxu0 0.0
    %1665 = vmatprep.subr.mxu0 0.0
    %1666 = vmatpush1.msra.mxu0 0.0
    %1667 = vmatprep.subr.mxu0 0.0
    %1668 = vmatpush1.msra.mxu0 0.0
    %1669 = vmatprep.subr.mxu0 0.0
    %1670 = vmatpush1.msra.mxu0 0.0
    %1671 = vmatprep.subr.mxu0 0.0
    %1672 = vmatpush1.msra.mxu0 0.0
    %1673 = vmatprep.subr.mxu0 0.0
    %1674 = vmatpush1.msra.mxu0 0.0
    %1675 = vmatprep.subr.mxu0 0.0
    %1676 = vmatpush1.msra.mxu0 0.0
    %1677 = vmatprep.subr.mxu0 0.0
    %1678 = vmatpush1.msra.mxu0 0.0
    %1679 = vmatprep.subr.mxu0 0.0
    %1680 = vmatpush1.msra.mxu0 0.0
    %1681 = vmatprep.mubr.f32.mxu0 0.0
    %1682 = vmatmul.mubr.f32.gmra.mrb[0].mxu0 %v1615
    %v1683 = vpop.f32.mrb[0].mxu0
    %v1684 = vadd.f32 0.0, %v1683
    %v1685 = vpop.f32.mrb[0].mxu0
    %v1686 = vadd.f32 0.0, %v1685
    %1687 = vdwg.mxu0
    %1688 = vmatprep.subr.mxu0 0.0
    %1689 = vmatpush1.msra.mxu0 %v544
    %1690 = vmatprep.subr.mxu0 0.0
    %1691 = vmatpush1.msra.mxu0 %v545
    %1692 = vmatprep.subr.mxu0 0.0
    %1693 = vmatpush1.msra.mxu0 %v546
    %1694 = vmatprep.subr.mxu0 0.0
    %1695 = vmatpush1.msra.mxu0 %v547
    %1696 = vmatprep.subr.mxu0 0.0
    %1697 = vmatpush1.msra.mxu0 %v548
    %1698 = vmatprep.subr.mxu0 0.0
    %1699 = vmatpush1.msra.mxu0 %v549
    %1700 = vmatprep.subr.mxu0 0.0
    %1701 = vmatpush1.msra.mxu0 %v550
    %1702 = vmatprep.subr.mxu0 0.0
    %1703 = vmatpush1.msra.mxu0 %v551
    %1704 = vmatprep.subr.mxu0 0.0
    %1705 = vmatpush1.msra.mxu0 %v552
    %1706 = vmatprep.subr.mxu0 0.0
    %1707 = vmatpush1.msra.mxu0 %v553
    %1708 = vmatprep.subr.mxu0 0.0
    %1709 = vmatpush1.msra.mxu0 %v554
    %1710 = vmatprep.subr.mxu0 0.0
    %1711 = vmatpush1.msra.mxu0 %v555
    %1712 = vmatprep.subr.mxu0 0.0
    %1713 = vmatpush1.msra.mxu0 %v556
    %1714 = vmatprep.subr.mxu0 0.0
    %1715 = vmatpush1.msra.mxu0 %v557
    %1716 = vmatprep.subr.mxu0 0.0
    %1717 = vmatpush1.msra.mxu0 %v558
    %1718 = vmatprep.subr.mxu0 0.0
    %1719 = vmatpush1.msra.mxu0 %v559
    %1720 = vmatprep.subr.mxu0 0.0
    %1721 = vmatpush1.msra.mxu0 0.0
    %1722 = vmatprep.subr.mxu0 0.0
    %1723 = vmatpush1.msra.mxu0 0.0
    %1724 = vmatprep.subr.mxu0 0.0
    %1725 = vmatpush1.msra.mxu0 0.0
    %1726 = vmatprep.subr.mxu0 0.0
    %1727 = vmatpush1.msra.mxu0 0.0
    %1728 = vmatprep.subr.mxu0 0.0
    %1729 = vmatpush1.msra.mxu0 0.0
    %1730 = vmatprep.subr.mxu0 0.0
    %1731 = vmatpush1.msra.mxu0 0.0
    %1732 = vmatprep.subr.mxu0 0.0
    %1733 = vmatpush1.msra.mxu0 0.0
    %1734 = vmatprep.subr.mxu0 0.0
    %1735 = vmatpush1.msra.mxu0 0.0
    %1736 = vmatprep.subr.mxu0 0.0
    %1737 = vmatpush1.msra.mxu0 0.0
    %1738 = vmatprep.subr.mxu0 0.0
    %1739 = vmatpush1.msra.mxu0 0.0
    %1740 = vmatprep.subr.mxu0 0.0
    %1741 = vmatpush1.msra.mxu0 0.0
    %1742 = vmatprep.subr.mxu0 0.0
    %1743 = vmatpush1.msra.mxu0 0.0
    %1744 = vmatprep.subr.mxu0 0.0
    %1745 = vmatpush1.msra.mxu0 0.0
    %1746 = vmatprep.subr.mxu0 0.0
    %1747 = vmatpush1.msra.mxu0 0.0
    %1748 = vmatprep.subr.mxu0 0.0
    %1749 = vmatpush1.msra.mxu0 0.0
    %1750 = vmatprep.subr.mxu0 0.0
    %1751 = vmatpush1.msra.mxu0 0.0
    %1752 = vmatprep.mubr.f32.mxu0 0.0
    %1753 = vmatmul.mubr.f32.gmra.mrb[0].mxu0 %v1615
    %v1754 = vpop.f32.mrb[0].mxu0
    %v1755 = vadd.f32 %v213, %v1754
    %v1756 = vpop.f32.mrb[0].mxu0
    %1757 = vdwg.mxu0
    %v1759 = vrot.slane %v1684, 1
    %v1761 = vadd.f32 %v139, %v1759
    %v1762 = vxor.u32 %v1761, 2147483648
    %v1763 = vmul.f32 %v1762, 1.442695
    %v1764 = vpow.pop %v1763
    %v1765 = vadd.f32 %v1764, 1.0
    %v1766 = vrcp.pop %v1765
    %v1767 = vmul.f32 1.0, %v1766
    %v1769 = vrot.slane %v1686, 1
    %v1771 = vadd.f32 %v141, %v1769
    %v1772 = vxor.u32 %v1771, 2147483648
    %v1773 = vmul.f32 %v1772, 1.442695
    %v1774 = vpow.pop %v1773
    %v1775 = vadd.f32 %v1774, 1.0
    %v1776 = vrcp.pop %v1775
    %v1777 = vmul.f32 1.0, %v1776
    %v1779 = vrot.slane %v1755, 1
    %v1781 = vmul.f32 %v1767, %v1779
    %v1782 = vadd.f32 %v210, %v1781
    %v1783 = vtanh.pop %v1782
    %v1784 = vsub.f32 1.0, %v1777
    %v1785 = vmul.f32 %v1784, %v1783
    %v1786 = vrot.slane %v1613, 7
    %v1788 = vmul.f32 %v1777, %v1786
    %v1789 = vadd.f32 %v1785, %v1788
    %1790 = vst [vmem:[%s2 - $0x6] sm:$0x80] %v1789
    // Predicated region
    $region18: #{decoder_rnn_forward.1} parent=1 // pred_check
      _
    $region19: #{decoder_rnn_forward.1} parent=1 // pred_check_branch
      %1792 = sbr.rel (0) target = $region21
    $region20: #{decoder_rnn_forward.1} parent=1 // pred_region
      _
    $region21: #{decoder_rnn_forward.1} parent=1 // pred_fallthru
      _
    // Predicated region
    $region22: #{decoder_rnn_forward.1} parent=1 // pred_check
      _
    $region23: #{decoder_rnn_forward.1} parent=1 // pred_check_branch
      %1794 = sbr.rel (0) target = $region25
    $region24: #{decoder_rnn_forward.1} parent=1 // pred_region
      _
    $region25: #{decoder_rnn_forward.1} parent=1 // pred_fallthru
      _
    %1795 = vsyncpa [#allocation3], 1
    %1796 = vsyncpa [#allocation5], 1

</llo_original>
